<compile_context>
chip_gen: v5e
topology: v5e:2x2
jax: 0.10.0
libtpu: 0.0.40
codegen_flags: <defaults>
</compile_context>

<pallas_src>
import functools

import jax
import jax.numpy as jnp
from jax.experimental import pallas as pl
from jax.experimental.pallas import tpu as pltpu


def _attention_kernel(x_ref, gamma_ref, beta_ref, wq_ref, wk_ref, wv_ref,
                      wo_ref, bo_ref, o_ref, xn_ref, acc_ref, *, scale, eps):
    h = pl.program_id(1)
    num_heads = pl.num_programs(1)

    @pl.when(h == 0)
    def _():
        # LayerNorm over the feature dim, once per batch row; reused by all heads since
        # the x block index is fixed across the heads axis (x stays resident in VMEM).
        x = x_ref[0].astype(jnp.float32)                          # (N, dim)
        mean = jnp.mean(x, axis=-1, keepdims=True)
        xc = x - mean
        var = jnp.mean(xc * xc, axis=-1, keepdims=True)
        xn_ref[...] = (xc * jax.lax.rsqrt(var + eps)) * gamma_ref[...] + beta_ref[...]
        acc_ref[...] = jnp.zeros_like(acc_ref)

    xn = xn_ref[...]                                              # (N, dim) f32

    # Per-head q/k/v projections: (N, dim) @ (dim, dim_head) on the MXU, f32 accumulate.
    q = jnp.dot(xn, wq_ref[0], preferred_element_type=jnp.float32)
    k = jnp.dot(xn, wk_ref[0], preferred_element_type=jnp.float32)
    v = jnp.dot(xn, wv_ref[0], preferred_element_type=jnp.float32)

    # Scores: contract the head dim of q and k (q @ k^T) without an explicit transpose.
    dots = jax.lax.dot_general(
        q, k, (((1,), (1,)), ((), ())),
        preferred_element_type=jnp.float32) * scale               # (N, N)

    # Numerically-stable softmax along the key axis. Dropout(p=0.0) is identity.
    dots = dots - jnp.max(dots, axis=-1, keepdims=True)
    p = jnp.exp(dots)
    attn = p / jnp.sum(p, axis=-1, keepdims=True)

    out_h = jnp.dot(attn, v, preferred_element_type=jnp.float32)  # (N, dim_head)

    # Output projection for this head, accumulated over the heads (reduction) axis.
    acc_ref[...] += jnp.dot(out_h, wo_ref[0], preferred_element_type=jnp.float32)

    @pl.when(h == num_heads - 1)
    def _():
        o_ref[0] = (acc_ref[...] + bo_ref[...]).astype(o_ref.dtype)


def attention(x, gamma, beta, w_qkv, w_out, b_out, *, heads, dim_head, eps=1e-5):
    """x: (B, N, dim). w_qkv: (dim, 3*heads*dim_head)  [transposed vs PyTorch, q|k|v chunks,
    each chunk column-ordered (head, dim_head)]. w_out: (heads*dim_head, dim). b_out: (dim,)."""
    B, N, dim = x.shape
    inner = heads * dim_head
    assert w_qkv.shape == (dim, 3 * inner)
    assert w_out.shape == (inner, dim)

    scale = float(dim_head) ** -0.5

    # One-time (XLA, outside the kernel) rearrangement into per-head weight blocks.
    wq, wk, wv = jnp.split(w_qkv, 3, axis=-1)                       # (dim, inner) each

    def per_head(w):
        return w.reshape(dim, heads, dim_head).transpose(1, 0, 2)   # (heads, dim, dim_head)

    wq, wk, wv = per_head(wq), per_head(wk), per_head(wv)
    wo = w_out.reshape(heads, dim_head, dim)                        # (heads, dim_head, dim)

    gamma2 = gamma.reshape(1, dim).astype(jnp.float32)
    beta2 = beta.reshape(1, dim).astype(jnp.float32)
    bo2 = b_out.reshape(1, dim).astype(jnp.float32)

    grid = (B, heads)

    out = pl.pallas_call(
        functools.partial(_attention_kernel, scale=scale, eps=eps),
        out_shape=jax.ShapeDtypeStruct((B, N, dim), x.dtype),
        grid_spec=pltpu.PrefetchScalarGridSpec(
            num_scalar_prefetch=0,
            grid=grid,
            in_specs=[
                pl.BlockSpec((1, N, dim), lambda b, h: (b, 0, 0)),         # x (resident per b)
                pl.BlockSpec((1, dim), lambda b, h: (0, 0)),               # gamma
                pl.BlockSpec((1, dim), lambda b, h: (0, 0)),               # beta
                pl.BlockSpec((1, dim, dim_head), lambda b, h: (h, 0, 0)),  # wq head block
                pl.BlockSpec((1, dim, dim_head), lambda b, h: (h, 0, 0)),  # wk head block
                pl.BlockSpec((1, dim, dim_head), lambda b, h: (h, 0, 0)),  # wv head block
                pl.BlockSpec((1, dim_head, dim), lambda b, h: (h, 0, 0)),  # w_out head block
                pl.BlockSpec((1, dim), lambda b, h: (0, 0)),               # b_out
            ],
            out_specs=pl.BlockSpec((1, N, dim), lambda b, h: (b, 0, 0)),
            scratch_shapes=[pltpu.VMEM((N, dim), jnp.float32),             # normalized x
                            pltpu.VMEM((N, dim), jnp.float32)],            # f32 accumulator
        ),
        compiler_params=pltpu.CompilerParams(
            dimension_semantics=("parallel", "arbitrary")),
    )(x, gamma2, beta2, wq, wk, wv, wo, bo2)

    return out


def attention_ref(x, gamma, beta, w_qkv, w_out, b_out, *, heads, dim_head, eps=1e-5):
    B, N, dim = x.shape
    inner = heads * dim_head
    xf = x.astype(jnp.float32)
    mean = jnp.mean(xf, axis=-1, keepdims=True)
    var = jnp.mean((xf - mean) ** 2, axis=-1, keepdims=True)
    xn = (xf - mean) * jax.lax.rsqrt(var + eps) * gamma + beta
    qkv = xn @ w_qkv
    q, k, v = jnp.split(qkv, 3, axis=-1)

    def split_heads(t):
        return t.reshape(B, N, heads, dim_head).transpose(0, 2, 1, 3)

    q, k, v = split_heads(q), split_heads(k), split_heads(v)
    dots = jnp.einsum('bhnd,bhmd->bhnm', q, k) * (float(dim_head) ** -0.5)
    attn = jax.nn.softmax(dots, axis=-1)
    out = jnp.einsum('bhnm,bhmd->bhnd', attn, v)
    out = out.transpose(0, 2, 1, 3).reshape(B, N, inner)
    return (out @ w_out + b_out).astype(x.dtype)


if __name__ == "__main__":
    B, N, dim = 2, 128, 128            # lane-dense seq / feature dims
    heads, dim_head = 8, 64            # PyTorch module defaults
    inner = heads * dim_head

    key = jax.random.PRNGKey(0)
    kx, kg, kb, kqkv, kwo, kbo = jax.random.split(key, 6)

    x = jax.random.normal(kx, (B, N, dim), dtype=jnp.float32)

    # LayerNorm params (PyTorch init weight=1, bias=0; perturbed deterministically).
    gamma = jnp.ones((dim,), jnp.float32) + 0.01 * jax.random.normal(kg, (dim,), jnp.float32)
    beta = 0.01 * jax.random.normal(kb, (dim,), jnp.float32)

    # Linear params, stored transposed vs PyTorch (in, out).
    w_qkv = jax.random.normal(kqkv, (dim, 3 * inner), jnp.float32) / jnp.sqrt(float(dim))
    w_out = jax.random.normal(kwo, (inner, dim), jnp.float32) / jnp.sqrt(float(inner))
    b_out = 0.01 * jax.random.normal(kbo, (dim,), jnp.float32)

    out = attention(x, gamma, beta, w_qkv, w_out, b_out, heads=heads, dim_head=dim_head)
    out = jax.block_until_ready(out)

    ref = attention_ref(x, gamma, beta, w_qkv, w_out, b_out, heads=heads, dim_head=dim_head)
    assert out.shape == (B, N, dim)
    err = jnp.max(jnp.abs(out - ref))
    assert jnp.allclose(out, ref, atol=2e-3, rtol=2e-3), f"mismatch vs JAX reference: {err}"

    print("KERNEL_OK")
</pallas_src>

<mosaic_0001>
module attributes {stable_mosaic.version = 11 : i64} {
  func.func @_attention_kernel(%arg0: i32, %arg1: i32, %arg2: memref<1x128x128xf32, #tpu.memory_space<vmem>>, %arg3: memref<1x128xf32, #tpu.memory_space<vmem>>, %arg4: memref<1x128xf32, #tpu.memory_space<vmem>>, %arg5: memref<1x128x64xf32, #tpu.memory_space<vmem>>, %arg6: memref<1x128x64xf32, #tpu.memory_space<vmem>>, %arg7: memref<1x128x64xf32, #tpu.memory_space<vmem>>, %arg8: memref<1x64x128xf32, #tpu.memory_space<vmem>>, %arg9: memref<1x128xf32, #tpu.memory_space<vmem>>, %arg10: memref<1x128x128xf32, #tpu.memory_space<vmem>>, %arg11: memref<128x128xf32, #tpu.memory_space<vmem>>, %arg12: memref<128x128xf32, #tpu.memory_space<vmem>>) attributes {dimension_semantics = [#tpu.dimension_semantics<parallel>, #tpu.dimension_semantics<arbitrary>], iteration_bounds = array<i64: 2, 8>, scalar_prefetch = 0 : i64, scratch_operands = 2 : i64, tpu.core_type = #tpu.core_type<tc>, window_params = [{transform_indices = @transform_0, window_bounds = array<i64: 1, 128, 128>}, {pipeline_mode = #tpu.pipeline_mode<synchronous>, transform_indices = @transform_1, window_bounds = array<i64: 1, 128>}, {pipeline_mode = #tpu.pipeline_mode<synchronous>, transform_indices = @transform_2, window_bounds = array<i64: 1, 128>}, {transform_indices = @transform_3, window_bounds = array<i64: 1, 128, 64>}, {transform_indices = @transform_4, window_bounds = array<i64: 1, 128, 64>}, {transform_indices = @transform_5, window_bounds = array<i64: 1, 128, 64>}, {transform_indices = @transform_6, window_bounds = array<i64: 1, 64, 128>}, {pipeline_mode = #tpu.pipeline_mode<synchronous>, transform_indices = @transform_7, window_bounds = array<i64: 1, 128>}, {transform_indices = @transform_8, window_bounds = array<i64: 1, 128, 128>}]} {
    %c0_i32 = arith.constant 0 : i32
    %0 = arith.cmpi eq, %arg1, %c0_i32 : i32
    %1 = arith.extui %0 : i1 to i32
    %c0_i32_0 = arith.constant 0 : i32
    %2 = arith.cmpi ne, %1, %c0_i32_0 : i32
    scf.if %2 {
      %c0_27 = arith.constant 0 : index
      %c0_28 = arith.constant 0 : index
      %c0_29 = arith.constant 0 : index
      %35 = vector.load %arg2[%c0_27, %c0_28, %c0_29] : memref<1x128x128xf32, #tpu.memory_space<vmem>>, vector<1x128x128xf32>
      %36 = vector.shape_cast %35 : vector<1x128x128xf32> to vector<128x128xf32>
      %cst_30 = arith.constant dense<0.000000e+00> : vector<128xf32>
      %37 = vector.multi_reduction <add>, %36, %cst_30 [1] : vector<128x128xf32> to vector<128xf32>
      %38 = vector.shape_cast %37 : vector<128xf32> to vector<128x1xf32>
      %cst_31 = arith.constant 1.280000e+02 : f32
      %39 = vector.broadcast %cst_31 : f32 to vector<128x1xf32>
      %40 = arith.divf %38, %39 : vector<128x1xf32>
      %41 = vector.broadcast %40 : vector<128x1xf32> to vector<128x128xf32>
      %42 = arith.subf %36, %41 : vector<128x128xf32>
      %43 = arith.mulf %42, %42 : vector<128x128xf32>
      %cst_32 = arith.constant dense<0.000000e+00> : vector<128xf32>
      %44 = vector.multi_reduction <add>, %43, %cst_32 [1] : vector<128x128xf32> to vector<128xf32>
      %45 = vector.shape_cast %44 : vector<128xf32> to vector<128x1xf32>
      %cst_33 = arith.constant 1.280000e+02 : f32
      %46 = vector.broadcast %cst_33 : f32 to vector<128x1xf32>
      %47 = arith.divf %45, %46 : vector<128x1xf32>
      %cst_34 = arith.constant 9.99999974E-6 : f32
      %48 = vector.broadcast %cst_34 : f32 to vector<128x1xf32>
      %49 = arith.addf %47, %48 : vector<128x1xf32>
      %50 = math.rsqrt %49 : vector<128x1xf32>
      %51 = vector.broadcast %50 : vector<128x1xf32> to vector<128x128xf32>
      %52 = arith.mulf %42, %51 : vector<128x128xf32>
      %c0_35 = arith.constant 0 : index
      %c0_36 = arith.constant 0 : index
      %53 = vector.load %arg3[%c0_35, %c0_36] : memref<1x128xf32, #tpu.memory_space<vmem>>, vector<1x128xf32>
      %54 = vector.broadcast %53 : vector<1x128xf32> to vector<128x128xf32>
      %55 = arith.mulf %52, %54 : vector<128x128xf32>
      %c0_37 = arith.constant 0 : index
      %c0_38 = arith.constant 0 : index
      %56 = vector.load %arg4[%c0_37, %c0_38] : memref<1x128xf32, #tpu.memory_space<vmem>>, vector<1x128xf32>
      %57 = vector.broadcast %56 : vector<1x128xf32> to vector<128x128xf32>
      %58 = arith.addf %55, %57 : vector<128x128xf32>
      %c0_39 = arith.constant 0 : index
      %c0_40 = arith.constant 0 : index
      %59 = vector.load %arg11[%c0_39, %c0_40] : memref<128x128xf32, #tpu.memory_space<vmem>>, vector<128x128xf32>
      tpu.vector_store %arg11[%c0_39, %c0_40], %58 {strides = array<i32>} : memref<128x128xf32, #tpu.memory_space<vmem>>, vector<128x128xf32>,
      %cst_41 = arith.constant 0.000000e+00 : f32
      %60 = vector.broadcast %cst_41 : f32 to vector<128x128xf32>
      %c0_42 = arith.constant 0 : index
      %c0_43 = arith.constant 0 : index
      %61 = vector.load %arg12[%c0_42, %c0_43] : memref<128x128xf32, #tpu.memory_space<vmem>>, vector<128x128xf32>
      tpu.vector_store %arg12[%c0_42, %c0_43], %60 {strides = array<i32>} : memref<128x128xf32, #tpu.memory_space<vmem>>, vector<128x128xf32>,
    } else {
    }
    %c0 = arith.constant 0 : index
    %c0_1 = arith.constant 0 : index
    %3 = vector.load %arg11[%c0, %c0_1] : memref<128x128xf32, #tpu.memory_space<vmem>>, vector<128x128xf32>
    %c0_2 = arith.constant 0 : index
    %c0_3 = arith.constant 0 : index
    %c0_4 = arith.constant 0 : index
    %4 = vector.load %arg5[%c0_2, %c0_3, %c0_4] : memref<1x128x64xf32, #tpu.memory_space<vmem>>, vector<1x128x64xf32>
    %5 = vector.shape_cast %4 : vector<1x128x64xf32> to vector<128x64xf32>
    %cst = arith.constant dense<0.000000e+00> : vector<128x64xf32>
    %6 = tpu.matmul %3, %5, %cst {dimension_numbers = #tpu.dot_dimension_numbers<[1], [0], [0], [1], [0, 0, 1, 1], [], []>} : vector<128x128xf32>, vector<128x64xf32>, vector<128x64xf32> -> vector<128x64xf32>
    %c0_5 = arith.constant 0 : index
    %c0_6 = arith.constant 0 : index
    %c0_7 = arith.constant 0 : index
    %7 = vector.load %arg6[%c0_5, %c0_6, %c0_7] : memref<1x128x64xf32, #tpu.memory_space<vmem>>, vector<1x128x64xf32>
    %8 = vector.shape_cast %7 : vector<1x128x64xf32> to vector<128x64xf32>
    %cst_8 = arith.constant dense<0.000000e+00> : vector<128x64xf32>
    %9 = tpu.matmul %3, %8, %cst_8 {dimension_numbers = #tpu.dot_dimension_numbers<[1], [0], [0], [1], [0, 0, 1, 1], [], []>} : vector<128x128xf32>, vector<128x64xf32>, vector<128x64xf32> -> vector<128x64xf32>
    %c0_9 = arith.constant 0 : index
    %c0_10 = arith.constant 0 : index
    %c0_11 = arith.constant 0 : index
    %10 = vector.load %arg7[%c0_9, %c0_10, %c0_11] : memref<1x128x64xf32, #tpu.memory_space<vmem>>, vector<1x128x64xf32>
    %11 = vector.shape_cast %10 : vector<1x128x64xf32> to vector<128x64xf32>
    %cst_12 = arith.constant dense<0.000000e+00> : vector<128x64xf32>
    %12 = tpu.matmul %3, %11, %cst_12 {dimension_numbers = #tpu.dot_dimension_numbers<[1], [0], [0], [1], [0, 0, 1, 1], [], []>} : vector<128x128xf32>, vector<128x64xf32>, vector<128x64xf32> -> vector<128x64xf32>
    %cst_13 = arith.constant dense<0.000000e+00> : vector<128x128xf32>
    %13 = tpu.matmul %6, %9, %cst_13 {dimension_numbers = #tpu.dot_dimension_numbers<[1], [1], [0], [0], [0, 0, 1, 0], [], []>} : vector<128x64xf32>, vector<128x64xf32>, vector<128x128xf32> -> vector<128x128xf32>
    %cst_14 = arith.constant 1.250000e-01 : f32
    %14 = vector.broadcast %cst_14 : f32 to vector<128x128xf32>
    %15 = arith.mulf %13, %14 : vector<128x128xf32>
    %cst_15 = arith.constant dense<0xFF800000> : vector<128xf32>
    %16 = vector.multi_reduction <maximumf>, %15, %cst_15 [1] : vector<128x128xf32> to vector<128xf32>
    %17 = vector.shape_cast %16 : vector<128xf32> to vector<128x1xf32>
    %18 = vector.broadcast %17 : vector<128x1xf32> to vector<128x128xf32>
    %19 = arith.subf %15, %18 : vector<128x128xf32>
    %20 = math.exp %19 : vector<128x128xf32>
    %cst_16 = arith.constant dense<0.000000e+00> : vector<128xf32>
    %21 = vector.multi_reduction <add>, %20, %cst_16 [1] : vector<128x128xf32> to vector<128xf32>
    %22 = vector.shape_cast %21 : vector<128xf32> to vector<128x1xf32>
    %23 = vector.broadcast %22 : vector<128x1xf32> to vector<128x128xf32>
    %24 = arith.divf %20, %23 : vector<128x128xf32>
    %cst_17 = arith.constant dense<0.000000e+00> : vector<128x64xf32>
    %25 = tpu.matmul %24, %12, %cst_17 {dimension_numbers = #tpu.dot_dimension_numbers<[1], [0], [0], [1], [0, 0, 1, 1], [], []>} : vector<128x128xf32>, vector<128x64xf32>, vector<128x64xf32> -> vector<128x64xf32>
    %c0_18 = arith.constant 0 : index
    %c0_19 = arith.constant 0 : index
    %26 = vector.load %arg12[%c0_18, %c0_19] : memref<128x128xf32, #tpu.memory_space<vmem>>, vector<128x128xf32>
    %c0_20 = arith.constant 0 : index
    %c0_21 = arith.constant 0 : index
    %c0_22 = arith.constant 0 : index
    %27 = vector.load %arg8[%c0_20, %c0_21, %c0_22] : memref<1x64x128xf32, #tpu.memory_space<vmem>>, vector<1x64x128xf32>
    %28 = vector.shape_cast %27 : vector<1x64x128xf32> to vector<64x128xf32>
    %cst_23 = arith.constant dense<0.000000e+00> : vector<128x128xf32>
    %29 = tpu.matmul %25, %28, %cst_23 {dimension_numbers = #tpu.dot_dimension_numbers<[1], [0], [0], [1], [0, 0, 1, 1], [], []>} : vector<128x64xf32>, vector<64x128xf32>, vector<128x128xf32> -> vector<128x128xf32>
    %30 = arith.addf %26, %29 : vector<128x128xf32>
    %c0_24 = arith.constant 0 : index
    %c0_25 = arith.constant 0 : index
    %31 = vector.load %arg12[%c0_24, %c0_25] : memref<128x128xf32, #tpu.memory_space<vmem>>, vector<128x128xf32>
    tpu.vector_store %arg12[%c0_24, %c0_25], %30 {strides = array<i32>} : memref<128x128xf32, #tpu.memory_space<vmem>>, vector<128x128xf32>,
    %c7_i32 = arith.constant 7 : i32
    %32 = arith.cmpi eq, %arg1, %c7_i32 : i32
    %33 = arith.extui %32 : i1 to i32
    %c0_i32_26 = arith.constant 0 : i32
    %34 = arith.cmpi ne, %33, %c0_i32_26 : i32
    scf.if %34 {
      %c0_27 = arith.constant 0 : index
      %c0_28 = arith.constant 0 : index
      %35 = vector.load %arg12[%c0_27, %c0_28] : memref<128x128xf32, #tpu.memory_space<vmem>>, vector<128x128xf32>
      %c0_29 = arith.constant 0 : index
      %c0_30 = arith.constant 0 : index
      %36 = vector.load %arg9[%c0_29, %c0_30] : memref<1x128xf32, #tpu.memory_space<vmem>>, vector<1x128xf32>
      %37 = vector.broadcast %36 : vector<1x128xf32> to vector<128x128xf32>
      %38 = arith.addf %35, %37 : vector<128x128xf32>
      %c0_31 = arith.constant 0 : index
      %c0_32 = arith.constant 0 : index
      %c0_33 = arith.constant 0 : index
      %39 = vector.load %arg10[%c0_31, %c0_32, %c0_33] : memref<1x128x128xf32, #tpu.memory_space<vmem>>, vector<1x128x128xf32>
      %40 = vector.shape_cast %39 : vector<1x128x128xf32> to vector<128x128xf32>
      %41 = vector.shape_cast %38 : vector<128x128xf32> to vector<1x128x128xf32>
      tpu.vector_store %arg10[%c0_31, %c0_32, %c0_33], %41 {strides = array<i32>} : memref<1x128x128xf32, #tpu.memory_space<vmem>>, vector<1x128x128xf32>,
    } else {
    }
    return
  }
  func.func @transform_0(%arg0: i32, %arg1: i32) -> (i32, i32, i32) {
    %c0_i32 = arith.constant 0 : i32
    %c0_i32_0 = arith.constant 0 : i32
    %c0_i32_1 = arith.constant 0 : i32
    return %arg0, %c0_i32, %c0_i32_0 : i32, i32, i32
  }
  func.func @transform_1(%arg0: i32, %arg1: i32) -> (i32, i32) {
    %c0_i32 = arith.constant 0 : i32
    %c0_i32_0 = arith.constant 0 : i32
    %c0_i32_1 = arith.constant 0 : i32
    return %c0_i32, %c0_i32_0 : i32, i32
  }
  func.func @transform_2(%arg0: i32, %arg1: i32) -> (i32, i32) {
    %c0_i32 = arith.constant 0 : i32
    %c0_i32_0 = arith.constant 0 : i32
    %c0_i32_1 = arith.constant 0 : i32
    return %c0_i32, %c0_i32_0 : i32, i32
  }
  func.func @transform_3(%arg0: i32, %arg1: i32) -> (i32, i32, i32) {
    %c0_i32 = arith.constant 0 : i32
    %c0_i32_0 = arith.constant 0 : i32
    %c0_i32_1 = arith.constant 0 : i32
    return %arg1, %c0_i32, %c0_i32_0 : i32, i32, i32
  }
  func.func @transform_4(%arg0: i32, %arg1: i32) -> (i32, i32, i32) {
    %c0_i32 = arith.constant 0 : i32
    %c0_i32_0 = arith.constant 0 : i32
    %c0_i32_1 = arith.constant 0 : i32
    return %arg1, %c0_i32, %c0_i32_0 : i32, i32, i32
  }
  func.func @transform_5(%arg0: i32, %arg1: i32) -> (i32, i32, i32) {
    %c0_i32 = arith.constant 0 : i32
    %c0_i32_0 = arith.constant 0 : i32
    %c0_i32_1 = arith.constant 0 : i32
    return %arg1, %c0_i32, %c0_i32_0 : i32, i32, i32
  }
  func.func @transform_6(%arg0: i32, %arg1: i32) -> (i32, i32, i32) {
    %c0_i32 = arith.constant 0 : i32
    %c0_i32_0 = arith.constant 0 : i32
    %c0_i32_1 = arith.constant 0 : i32
    return %arg1, %c0_i32, %c0_i32_0 : i32, i32, i32
  }
  func.func @transform_7(%arg0: i32, %arg1: i32) -> (i32, i32) {
    %c0_i32 = arith.constant 0 : i32
    %c0_i32_0 = arith.constant 0 : i32
    %c0_i32_1 = arith.constant 0 : i32
    return %c0_i32, %c0_i32_0 : i32, i32
  }
  func.func @transform_8(%arg0: i32, %arg1: i32) -> (i32, i32, i32) {
    %c0_i32 = arith.constant 0 : i32
    %c0_i32_0 = arith.constant 0 : i32
    %c0_i32_1 = arith.constant 0 : i32
    return %arg0, %c0_i32, %c0_i32_0 : i32, i32, i32
  }
}

</mosaic_0001>

<llo_original>
// kernel: tpu_custom_call.1
$region0: #{tpu_custom_call.1}
  #allocation0 [shape = 'u32[]', space=smem, size = 0x4, offset = 0x4, fixed_abs, tag = 'smem constant byte address 0x4 - core index']
  #allocation1 [shape = 'u32[72,128]{1,0:T(1,128)}', space=vmem, size = 0x9000, scoped, tag = 'internal scratch']
  #allocation2 [shape = 'f32[128,128]{1,0:T(8,128)}', space=vmem, size = 0x10000, scoped, tag = 'scratch operand']
  #allocation3 [shape = 'f32[128,128]{1,0:T(8,128)}', space=vmem, size = 0x10000, scoped, tag = 'scratch operand']
  %s0 = inlined_call_operand.vmem [shape: f32[2,128,128], index: 0, kind: input, shape index: {}]
  %s1 = inlined_call_operand.vmem [shape: f32[1,128], index: 1, kind: input, shape index: {}]
  %s2 = inlined_call_operand.vmem [shape: f32[1,128], index: 2, kind: input, shape index: {}]
  %s3 = inlined_call_operand.vmem [shape: f32[8,128,64], index: 3, kind: input, shape index: {}]
  %s4 = inlined_call_operand.vmem [shape: f32[8,128,64], index: 4, kind: input, shape index: {}]
  %s5 = inlined_call_operand.vmem [shape: f32[8,128,64], index: 5, kind: input, shape index: {}]
  %s6 = inlined_call_operand.vmem [shape: f32[8,64,128], index: 6, kind: input, shape index: {}]
  %s7 = inlined_call_operand.vmem [shape: f32[1,128], index: 7, kind: input, shape index: {}]
  %s8 = inlined_call_operand.hbm [shape: f32[2,128,128], index: 8, kind: output, shape index: {}]
  %s9 = sld [smem:[#allocation0]]
  $region73: #{tpu_custom_call.1} parent=0
    _
  %s11 = ssub.s32 1, %s9
  %s12 = scalar_select 0, %s11, %s9
  $region1: #{tpu_custom_call.1} parent=0
    #allocation4 [shape = 'u8[131072]{0}', space=vmem, size = 0x20000, scoped, tag = 'output window, operand 0']
    #allocation5 [shape = 's32[2]{0}', space=sflag, size = 0x8, scoped, tag = 'scoped memory for tpu_custom_call.1']
    %13 = vsyncpa [#allocation5], 0
    %s14 = scalar_lea.sflag [#allocation5], 1
    %15 = vsyncpa %s14, 0
    loop: start=0, step=1, limit=18
    $region2: #{tpu_custom_call.1} parent=1 // loop_pre_header
      _
    $region3: #{tpu_custom_call.1} parent=1 // loop_header
      %s17 = sphi 0, %s21
      %p18 = scmp.ge.s32.totalorder %s17, 18
      %s24 = sphi 0, %s36
      %s25 = sphi 0, %s32
      %s26 = sphi 0, %s24
      %s27 = sphi 0, %s25
      %s28 = sphi 0, %s26
      %s29 = sphi 0, %s27
      %s39 = sphi 0, %s41
      %s42 = sphi 0, %s39
      %s43 = sphi 0, %s42
      %s59 = sphi 0, %s43
      %s63 = sphi 0, %s63
      %s65 = sphi 0, %s63
      %s66 = sphi 0, %s65
      %s80 = sphi 0, %s66
      %s84 = sphi 0, %s84
      %s86 = sphi 0, %s84
      %s87 = sphi 0, %s86
      %s101 = sphi 0, %s87
      %s107 = sphi 0, %s109
      %s110 = sphi 0, %s107
      %s111 = sphi 0, %s110
      %s127 = sphi 0, %s111
      %s133 = sphi 0, %s135
      %s136 = sphi 0, %s133
      %s137 = sphi 0, %s136
      %s153 = sphi 0, %s137
      %s159 = sphi 0, %s161
      %s162 = sphi 0, %s159
      %s163 = sphi 0, %s162
      %s179 = sphi 0, %s163
      %s185 = sphi 0, %s187
      %s188 = sphi 0, %s185
      %s189 = sphi 0, %s188
      %s205 = sphi 0, %s189
      %s209 = sphi 0, %s209
      %s211 = sphi 0, %s209
      %s212 = sphi 0, %s211
      %s226 = sphi 0, %s212
      %s232 = sphi 0, %s234
      %s235 = sphi 0, %s232
      %s236 = sphi 0, %s235
      %s252 = sphi 0, %s236
    $region4: #{tpu_custom_call.1} parent=1 // loop_header_branch
      %20 = sbr.rel (%p18) target = $region8
    $region5: #{tpu_custom_call.1} parent=1 // loop_body
      %s22 = ssub.s32 %s17, 1
      %s23 = ssub.s32 %s17, 2
      %s30 = sadd.s32 1, %s25
      %p31 = scmp.ge.s32.totalorder %s30, 8
      %s32 = scalar_select %p31, 0, %s30
      %s33 = sadd.s32 1, %s24
      %s34 = scalar_select %p31, %s33, %s24
      %p35 = scmp.ge.s32.totalorder %s34, 2
      %s36 = scalar_select %p35, 0, %s34
      %s37 = ssub.s32 %s24, %s36
      %p38 = scmp.eq.s32.totalorder %s37, 0
      %s40 = sadd.s32 %s39, 1
      %s41 = scalar_select %p38, %s39, %s40
      %p44 = pneg %p38
      %p45 = scmp.eq.s32.totalorder %s17, 15
      %p46 = por %p44, %p45
      %p47 = scmp.ne.s32.totalorder %s39, %s42
      %p48 = scmp.eq.s32.totalorder %s17, 0
      %p49 = por %p47, %p48
      %p50 = scmp.ne.s32.totalorder %s39, %s42
      %p51 = scmp.eq.s32.totalorder %s22, 15
      %p52 = por %p50, %p51
      %p53 = scmp.ne.s32.totalorder %s42, %s43
      %p54 = scmp.eq.s32.totalorder %s22, 0
      %p55 = por %p53, %p54
      %p56 = scmp.ne.s32.totalorder %s42, %s43
      %p57 = scmp.eq.s32.totalorder %s23, 15
      %p58 = por %p56, %p57
      %p60 = scmp.ne.s32.totalorder %s43, %s59
      %p61 = scmp.eq.s32.totalorder %s23, 0
      %p62 = por %p60, %p61
      %s64 = sadd.s32 %s63, 1
      %p67 = scmp.eq.s32.totalorder %s17, 15
      %p68 = scmp.ne.s32.totalorder %s63, %s65
      %p69 = scmp.eq.s32.totalorder %s17, 0
      %p70 = por %p68, %p69
      %p71 = scmp.ne.s32.totalorder %s63, %s65
      %p72 = scmp.eq.s32.totalorder %s22, 15
      %p73 = por %p71, %p72
      %p74 = scmp.ne.s32.totalorder %s65, %s66
      %p75 = scmp.eq.s32.totalorder %s22, 0
      %p76 = por %p74, %p75
      %p77 = scmp.ne.s32.totalorder %s65, %s66
      %p78 = scmp.eq.s32.totalorder %s23, 15
      %p79 = por %p77, %p78
      %p81 = scmp.ne.s32.totalorder %s66, %s80
      %p82 = scmp.eq.s32.totalorder %s23, 0
      %p83 = por %p81, %p82
      %s85 = sadd.s32 %s84, 1
      %p88 = scmp.eq.s32.totalorder %s17, 15
      %p89 = scmp.ne.s32.totalorder %s84, %s86
      %p90 = scmp.eq.s32.totalorder %s17, 0
      %p91 = por %p89, %p90
      %p92 = scmp.ne.s32.totalorder %s84, %s86
      %p93 = scmp.eq.s32.totalorder %s22, 15
      %p94 = por %p92, %p93
      %p95 = scmp.ne.s32.totalorder %s86, %s87
      %p96 = scmp.eq.s32.totalorder %s22, 0
      %p97 = por %p95, %p96
      %p98 = scmp.ne.s32.totalorder %s86, %s87
      %p99 = scmp.eq.s32.totalorder %s23, 15
      %p100 = por %p98, %p99
      %p102 = scmp.ne.s32.totalorder %s87, %s101
      %p103 = scmp.eq.s32.totalorder %s23, 0
      %p104 = por %p102, %p103
      %s105 = ssub.s32 %s25, %s32
      %p106 = scmp.eq.s32.totalorder %s105, 0
      %s108 = sadd.s32 %s107, 1
      %s109 = scalar_select %p106, %s107, %s108
      %p112 = pneg %p106
      %p113 = scmp.eq.s32.totalorder %s17, 15
      %p114 = por %p112, %p113
      %p115 = scmp.ne.s32.totalorder %s107, %s110
      %p116 = scmp.eq.s32.totalorder %s17, 0
      %p117 = por %p115, %p116
      %p118 = scmp.ne.s32.totalorder %s107, %s110
      %p119 = scmp.eq.s32.totalorder %s22, 15
      %p120 = por %p118, %p119
      %p121 = scmp.ne.s32.totalorder %s110, %s111
      %p122 = scmp.eq.s32.totalorder %s22, 0
      %p123 = por %p121, %p122
      %p124 = scmp.ne.s32.totalorder %s110, %s111
      %p125 = scmp.eq.s32.totalorder %s23, 15
      %p126 = por %p124, %p125
      %p128 = scmp.ne.s32.totalorder %s111, %s127
      %p129 = scmp.eq.s32.totalorder %s23, 0
      %p130 = por %p128, %p129
      %s131 = ssub.s32 %s25, %s32
      %p132 = scmp.eq.s32.totalorder %s131, 0
      %s134 = sadd.s32 %s133, 1
      %s135 = scalar_select %p132, %s133, %s134
      %p138 = pneg %p132
      %p139 = scmp.eq.s32.totalorder %s17, 15
      %p140 = por %p138, %p139
      %p141 = scmp.ne.s32.totalorder %s133, %s136
      %p142 = scmp.eq.s32.totalorder %s17, 0
      %p143 = por %p141, %p142
      %p144 = scmp.ne.s32.totalorder %s133, %s136
      %p145 = scmp.eq.s32.totalorder %s22, 15
      %p146 = por %p144, %p145
      %p147 = scmp.ne.s32.totalorder %s136, %s137
      %p148 = scmp.eq.s32.totalorder %s22, 0
      %p149 = por %p147, %p148
      %p150 = scmp.ne.s32.totalorder %s136, %s137
      %p151 = scmp.eq.s32.totalorder %s23, 15
      %p152 = por %p150, %p151
      %p154 = scmp.ne.s32.totalorder %s137, %s153
      %p155 = scmp.eq.s32.totalorder %s23, 0
      %p156 = por %p154, %p155
      %s157 = ssub.s32 %s25, %s32
      %p158 = scmp.eq.s32.totalorder %s157, 0
      %s160 = sadd.s32 %s159, 1
      %s161 = scalar_select %p158, %s159, %s160
      %p164 = pneg %p158
      %p165 = scmp.eq.s32.totalorder %s17, 15
      %p166 = por %p164, %p165
      %p167 = scmp.ne.s32.totalorder %s159, %s162
      %p168 = scmp.eq.s32.totalorder %s17, 0
      %p169 = por %p167, %p168
      %p170 = scmp.ne.s32.totalorder %s159, %s162
      %p171 = scmp.eq.s32.totalorder %s22, 15
      %p172 = por %p170, %p171
      %p173 = scmp.ne.s32.totalorder %s162, %s163
      %p174 = scmp.eq.s32.totalorder %s22, 0
      %p175 = por %p173, %p174
      %p176 = scmp.ne.s32.totalorder %s162, %s163
      %p177 = scmp.eq.s32.totalorder %s23, 15
      %p178 = por %p176, %p177
      %p180 = scmp.ne.s32.totalorder %s163, %s179
      %p181 = scmp.eq.s32.totalorder %s23, 0
      %p182 = por %p180, %p181
      %s183 = ssub.s32 %s25, %s32
      %p184 = scmp.eq.s32.totalorder %s183, 0
      %s186 = sadd.s32 %s185, 1
      %s187 = scalar_select %p184, %s185, %s186
      %p190 = pneg %p184
      %p191 = scmp.eq.s32.totalorder %s17, 15
      %p192 = por %p190, %p191
      %p193 = scmp.ne.s32.totalorder %s185, %s188
      %p194 = scmp.eq.s32.totalorder %s17, 0
      %p195 = por %p193, %p194
      %p196 = scmp.ne.s32.totalorder %s185, %s188
      %p197 = scmp.eq.s32.totalorder %s22, 15
      %p198 = por %p196, %p197
      %p199 = scmp.ne.s32.totalorder %s188, %s189
      %p200 = scmp.eq.s32.totalorder %s22, 0
      %p201 = por %p199, %p200
      %p202 = scmp.ne.s32.totalorder %s188, %s189
      %p203 = scmp.eq.s32.totalorder %s23, 15
      %p204 = por %p202, %p203
      %p206 = scmp.ne.s32.totalorder %s189, %s205
      %p207 = scmp.eq.s32.totalorder %s23, 0
      %p208 = por %p206, %p207
      %s210 = sadd.s32 %s209, 1
      %p213 = scmp.eq.s32.totalorder %s17, 15
      %p214 = scmp.ne.s32.totalorder %s209, %s211
      %p215 = scmp.eq.s32.totalorder %s17, 0
      %p216 = por %p214, %p215
      %p217 = scmp.ne.s32.totalorder %s209, %s211
      %p218 = scmp.eq.s32.totalorder %s22, 15
      %p219 = por %p217, %p218
      %p220 = scmp.ne.s32.totalorder %s211, %s212
      %p221 = scmp.eq.s32.totalorder %s22, 0
      %p222 = por %p220, %p221
      %p223 = scmp.ne.s32.totalorder %s211, %s212
      %p224 = scmp.eq.s32.totalorder %s23, 15
      %p225 = por %p223, %p224
      %p227 = scmp.ne.s32.totalorder %s212, %s226
      %p228 = scmp.eq.s32.totalorder %s23, 0
      %p229 = por %p227, %p228
      %s230 = ssub.s32 %s24, %s36
      %p231 = scmp.eq.s32.totalorder %s230, 0
      %s233 = sadd.s32 %s232, 1
      %s234 = scalar_select %p231, %s232, %s233
      %p237 = pneg %p231
      %p238 = scmp.eq.s32.totalorder %s17, 15
      %p239 = por %p237, %p238
      %p240 = scmp.ne.s32.totalorder %s232, %s235
      %p241 = scmp.eq.s32.totalorder %s17, 0
      %p242 = por %p240, %p241
      %p243 = scmp.ne.s32.totalorder %s232, %s235
      %p244 = scmp.eq.s32.totalorder %s22, 15
      %p245 = por %p243, %p244
      %p246 = scmp.ne.s32.totalorder %s235, %s236
      %p247 = scmp.eq.s32.totalorder %s22, 0
      %p248 = por %p246, %p247
      %p249 = scmp.ne.s32.totalorder %s235, %s236
      %p250 = scmp.eq.s32.totalorder %s23, 15
      %p251 = por %p249, %p250
      %p253 = scmp.ne.s32.totalorder %s236, %s252
      %p254 = scmp.eq.s32.totalorder %s23, 0
      %p255 = por %p253, %p254
      %p256 = scmp.le.s32.totalorder 1, %s17
      %p257 = scmp.lt.s32.totalorder %s17, 17
      %p258 = pnand %p256, %p257
      %p259 = pneg %p258
      // Predicated region
      $region9: #{tpu_custom_call.1} parent=5 // pred_check
        _
      $region10: #{tpu_custom_call.1} parent=5 // pred_check_branch
        %261 = sbr.rel (%p258) target = $region12
      $region11: #{tpu_custom_call.1} parent=5 // pred_region
        %s262 = ssub.s32 %s17, 1
        // Predicated region
        $region13: #{tpu_custom_call.1} parent=11 // pred_check
          %p263 = pneg %p76
        $region14: #{tpu_custom_call.1} parent=11 // pred_check_branch
          %265 = sbr.rel (%p263) target = $region16
        $region15: #{tpu_custom_call.1} parent=11 // pred_region
          _
        $region16: #{tpu_custom_call.1} parent=11 // pred_fallthru
          _
        // Predicated region
        $region17: #{tpu_custom_call.1} parent=11 // pred_check
          %p266 = pneg %p97
        $region18: #{tpu_custom_call.1} parent=11 // pred_check_branch
          %268 = sbr.rel (%p266) target = $region20
        $region19: #{tpu_custom_call.1} parent=11 // pred_region
          _
        $region20: #{tpu_custom_call.1} parent=11 // pred_fallthru
          _
        // Predicated region
        $region21: #{tpu_custom_call.1} parent=11 // pred_check
          %p269 = pneg %p222
        $region22: #{tpu_custom_call.1} parent=11 // pred_check_branch
          %271 = sbr.rel (%p269) target = $region24
        $region23: #{tpu_custom_call.1} parent=11 // pred_region
          _
        $region24: #{tpu_custom_call.1} parent=11 // pred_fallthru
          _
      $region12: #{tpu_custom_call.1} parent=5 // pred_fallthru
        _
      %p272 = scmp.lt.s32.totalorder %s17, 16
      // Predicated region
      $region25: #{tpu_custom_call.1} parent=5 // pred_check
        %p273 = pneg %p272
      $region26: #{tpu_custom_call.1} parent=5 // pred_check_branch
        %275 = sbr.rel (%p273) target = $region28
      $region27: #{tpu_custom_call.1} parent=5 // pred_region
        // Predicated region
        $region29: #{tpu_custom_call.1} parent=27 // pred_check
          %p276 = pneg %p49
        $region30: #{tpu_custom_call.1} parent=27 // pred_check_branch
          %278 = sbr.rel (%p276) target = $region32
        $region31: #{tpu_custom_call.1} parent=27 // pred_region
          %p279 = scmp.lt.s32.totalorder %s24, 1
          %s280 = scalar_select %p279, %s24, 1
          %s281 = smul.addr %s280, 16
          %s282 = smul.addr %s281, 8
          %s283 = scalar_lea.vmem %s0, %s282
        $region32: #{tpu_custom_call.1} parent=27 // pred_fallthru
          _
        // Predicated region
        $region33: #{tpu_custom_call.1} parent=27 // pred_check
          %p284 = pneg %p117
        $region34: #{tpu_custom_call.1} parent=27 // pred_check_branch
          %286 = sbr.rel (%p284) target = $region36
        $region35: #{tpu_custom_call.1} parent=27 // pred_region
          %p287 = scmp.lt.s32.totalorder %s25, 7
          %s288 = scalar_select %p287, %s25, 7
          %s289 = smul.addr %s288, 16
          %s290 = smul.addr %s289, 8
          %s291 = scalar_lea.vmem %s3, %s290
        $region36: #{tpu_custom_call.1} parent=27 // pred_fallthru
          _
        // Predicated region
        $region37: #{tpu_custom_call.1} parent=27 // pred_check
          %p292 = pneg %p143
        $region38: #{tpu_custom_call.1} parent=27 // pred_check_branch
          %294 = sbr.rel (%p292) target = $region40
        $region39: #{tpu_custom_call.1} parent=27 // pred_region
          %p295 = scmp.lt.s32.totalorder %s25, 7
          %s296 = scalar_select %p295, %s25, 7
          %s297 = smul.addr %s296, 16
          %s298 = smul.addr %s297, 8
          %s299 = scalar_lea.vmem %s4, %s298
        $region40: #{tpu_custom_call.1} parent=27 // pred_fallthru
          _
        // Predicated region
        $region41: #{tpu_custom_call.1} parent=27 // pred_check
          %p300 = pneg %p169
        $region42: #{tpu_custom_call.1} parent=27 // pred_check_branch
          %302 = sbr.rel (%p300) target = $region44
        $region43: #{tpu_custom_call.1} parent=27 // pred_region
          %p303 = scmp.lt.s32.totalorder %s25, 7
          %s304 = scalar_select %p303, %s25, 7
          %s305 = smul.addr %s304, 16
          %s306 = smul.addr %s305, 8
          %s307 = scalar_lea.vmem %s5, %s306
        $region44: #{tpu_custom_call.1} parent=27 // pred_fallthru
          _
        // Predicated region
        $region45: #{tpu_custom_call.1} parent=27 // pred_check
          %p308 = pneg %p195
        $region46: #{tpu_custom_call.1} parent=27 // pred_check_branch
          %310 = sbr.rel (%p308) target = $region48
        $region47: #{tpu_custom_call.1} parent=27 // pred_region
          %p311 = scmp.lt.s32.totalorder %s25, 7
          %s312 = scalar_select %p311, %s25, 7
          %s313 = smul.addr %s312, 8
          %s314 = smul.addr %s313, 8
          %s315 = scalar_lea.vmem %s6, %s314
        $region48: #{tpu_custom_call.1} parent=27 // pred_fallthru
          _
      $region28: #{tpu_custom_call.1} parent=5 // pred_fallthru
        _
      %p316 = scmp.le.s32.totalorder 1, %s17
      %p317 = scmp.lt.s32.totalorder %s17, 17
      %p318 = pnand %p316, %p317
      %p319 = pneg %p318
      // Predicated region
      $region49: #{tpu_custom_call.1} parent=5 // pred_check
        _
      $region50: #{tpu_custom_call.1} parent=5 // pred_check_branch
        %321 = sbr.rel (%p318) target = $region52
      $region51: #{tpu_custom_call.1} parent=5 // pred_region
        %s322 = ssub.s32 %s17, 1
        %p323 = scmp.lt.s32.totalorder %s26, 1
        %s324 = scalar_select %p323, %s26, 1
        %s325 = smul.addr %s324, 16
        %s326 = smul.addr %s325, 8
        %s327 = scalar_lea.vmem %s0, %s326
        %p328 = pneg %p55
        %p329 = pneg %p52
        %p330 = pneg %p76
        %p331 = pneg %p73
        %p332 = pneg %p97
        %p333 = pneg %p94
        %p334 = scmp.lt.s32.totalorder %s27, 7
        %s335 = scalar_select %p334, %s27, 7
        %s336 = smul.addr %s335, 16
        %s337 = smul.addr %s336, 8
        %s338 = scalar_lea.vmem %s3, %s337
        %p339 = pneg %p123
        %p340 = pneg %p120
        %p341 = scmp.lt.s32.totalorder %s27, 7
        %s342 = scalar_select %p341, %s27, 7
        %s343 = smul.addr %s342, 16
        %s344 = smul.addr %s343, 8
        %s345 = scalar_lea.vmem %s4, %s344
        %p346 = pneg %p149
        %p347 = pneg %p146
        %p348 = scmp.lt.s32.totalorder %s27, 7
        %s349 = scalar_select %p348, %s27, 7
        %s350 = smul.addr %s349, 16
        %s351 = smul.addr %s350, 8
        %s352 = scalar_lea.vmem %s5, %s351
        %p353 = pneg %p175
        %p354 = pneg %p172
        %p355 = scmp.lt.s32.totalorder %s27, 7
        %s356 = scalar_select %p355, %s27, 7
        %s357 = smul.addr %s356, 8
        %s358 = smul.addr %s357, 8
        %s359 = scalar_lea.vmem %s6, %s358
        %p360 = pneg %p201
        %p361 = pneg %p198
        %p362 = pneg %p222
        %p363 = pneg %p219
        %p364 = pneg %p248
        %p365 = pneg %p245
        %s366 = sand.u32 %s235, 1
        %s367 = scalar_lea.sflag [#allocation5], %s366
        %s368 = sand.u32 %s235, 1
        %s369 = smul.addr %s368, 128
        %s370 = scalar_lea.vmem [#allocation4], %s369
        %p371 = scmp.lt.s32.totalorder %s26, 1
        %s372 = scalar_select %p371, %s26, 1
        %s373 = smul.addr %s372, 16
        %s374 = smul.addr %s373, 8
        %s375 = scalar_lea.vmem %s0, %s374
        %p376 = scmp.lt.s32.totalorder %s27, 7
        %s377 = scalar_select %p376, %s27, 7
        %s378 = smul.addr %s377, 16
        %s379 = smul.addr %s378, 8
        %s380 = scalar_lea.vmem %s3, %s379
        %p381 = scmp.lt.s32.totalorder %s27, 7
        %s382 = scalar_select %p381, %s27, 7
        %s383 = smul.addr %s382, 16
        %s384 = smul.addr %s383, 8
        %s385 = scalar_lea.vmem %s4, %s384
        %p386 = scmp.lt.s32.totalorder %s27, 7
        %s387 = scalar_select %p386, %s27, 7
        %s388 = smul.addr %s387, 16
        %s389 = smul.addr %s388, 8
        %s390 = scalar_lea.vmem %s5, %s389
        %p391 = scmp.lt.s32.totalorder %s27, 7
        %s392 = scalar_select %p391, %s27, 7
        %s393 = smul.addr %s392, 8
        %s394 = smul.addr %s393, 8
        %s395 = scalar_lea.vmem %s6, %s394
        %p396 = scmp.eq.s32.totalorder %s27, 0
        // Predicated region
        $region53: #{tpu_custom_call.1} parent=51 // pred_check
          %p397 = pneg %p396
        $region54: #{tpu_custom_call.1} parent=51 // pred_check_branch
          %399 = sbr.rel (%p397) target = $region56
        $region55: #{tpu_custom_call.1} parent=51 // pred_region
          %v400 = vld [vmem:[%s375] sm:$0xff]
          %v401 = vld [vmem:[%s375 + $0x8] sm:$0xff]
          %v402 = vld [vmem:[%s375 + $0x10] sm:$0xff]
          %v403 = vld [vmem:[%s375 + $0x18] sm:$0xff]
          %v404 = vld [vmem:[%s375 + $0x20] sm:$0xff]
          %v405 = vld [vmem:[%s375 + $0x28] sm:$0xff]
          %v406 = vld [vmem:[%s375 + $0x30] sm:$0xff]
          %v407 = vld [vmem:[%s375 + $0x38] sm:$0xff]
          %v408 = vld [vmem:[%s375 + $0x40] sm:$0xff]
          %v409 = vld [vmem:[%s375 + $0x48] sm:$0xff]
          %v410 = vld [vmem:[%s375 + $0x50] sm:$0xff]
          %v411 = vld [vmem:[%s375 + $0x58] sm:$0xff]
          %v412 = vld [vmem:[%s375 + $0x60] sm:$0xff]
          %v413 = vld [vmem:[%s375 + $0x68] sm:$0xff]
          %v414 = vld [vmem:[%s375 + $0x70] sm:$0xff]
          %v415 = vld [vmem:[%s375 + $0x78] sm:$0xff]
          %416 = vadd.xlane.f32.xlu0 %v400
          %v417 = vpop.xlane.xlu0 %416
          %418 = vadd.xlane.f32.xlu0 %v401
          %v419 = vpop.xlane.xlu0 %418
          %420 = vadd.xlane.f32.xlu0 %v402
          %v421 = vpop.xlane.xlu0 %420
          %422 = vadd.xlane.f32.xlu0 %v403
          %v423 = vpop.xlane.xlu0 %422
          %424 = vadd.xlane.f32.xlu0 %v404
          %v425 = vpop.xlane.xlu0 %424
          %426 = vadd.xlane.f32.xlu0 %v405
          %v427 = vpop.xlane.xlu0 %426
          %428 = vadd.xlane.f32.xlu0 %v406
          %v429 = vpop.xlane.xlu0 %428
          %430 = vadd.xlane.f32.xlu0 %v407
          %v431 = vpop.xlane.xlu0 %430
          %432 = vadd.xlane.f32.xlu0 %v408
          %v433 = vpop.xlane.xlu0 %432
          %434 = vadd.xlane.f32.xlu0 %v409
          %v435 = vpop.xlane.xlu0 %434
          %436 = vadd.xlane.f32.xlu0 %v410
          %v437 = vpop.xlane.xlu0 %436
          %438 = vadd.xlane.f32.xlu0 %v411
          %v439 = vpop.xlane.xlu0 %438
          %440 = vadd.xlane.f32.xlu0 %v412
          %v441 = vpop.xlane.xlu0 %440
          %442 = vadd.xlane.f32.xlu0 %v413
          %v443 = vpop.xlane.xlu0 %442
          %444 = vadd.xlane.f32.xlu0 %v414
          %v445 = vpop.xlane.xlu0 %444
          %446 = vadd.xlane.f32.xlu0 %v415
          %v447 = vpop.xlane.xlu0 %446
          %v448 = vrcp.pop 128.0
          %v449 = vmul.f32 128.0, %v448
          %v450 = vsub.f32 1.0, %v449
          %v451 = vmul.f32 %v448, %v450
          %v452 = vadd.f32 %v448, %v451
          %vm453 = vweird.f32 %v448
          %v454 = vsel %vm453, %v448, %v452
          %v455 = vmul.f32 %v417, %v454
          %v456 = vmul.f32 %v419, %v454
          %v457 = vmul.f32 %v421, %v454
          %v458 = vmul.f32 %v423, %v454
          %v459 = vmul.f32 %v425, %v454
          %v460 = vmul.f32 %v427, %v454
          %v461 = vmul.f32 %v429, %v454
          %v462 = vmul.f32 %v431, %v454
          %v463 = vmul.f32 %v433, %v454
          %v464 = vmul.f32 %v435, %v454
          %v465 = vmul.f32 %v437, %v454
          %v466 = vmul.f32 %v439, %v454
          %v467 = vmul.f32 %v441, %v454
          %v468 = vmul.f32 %v443, %v454
          %v469 = vmul.f32 %v445, %v454
          %v470 = vmul.f32 %v447, %v454
          %v471 = vsub.f32 %v400, %v455
          %v472 = vsub.f32 %v401, %v456
          %v473 = vsub.f32 %v402, %v457
          %v474 = vsub.f32 %v403, %v458
          %v475 = vsub.f32 %v404, %v459
          %v476 = vsub.f32 %v405, %v460
          %v477 = vsub.f32 %v406, %v461
          %v478 = vsub.f32 %v407, %v462
          %v479 = vsub.f32 %v408, %v463
          %v480 = vsub.f32 %v409, %v464
          %v481 = vsub.f32 %v410, %v465
          %v482 = vsub.f32 %v411, %v466
          %v483 = vsub.f32 %v412, %v467
          %v484 = vsub.f32 %v413, %v468
          %v485 = vsub.f32 %v414, %v469
          %v486 = vsub.f32 %v415, %v470
          %v487 = vmul.f32 %v471, %v471
          %v488 = vmul.f32 %v472, %v472
          %v489 = vmul.f32 %v473, %v473
          %v490 = vmul.f32 %v474, %v474
          %v491 = vmul.f32 %v475, %v475
          %v492 = vmul.f32 %v476, %v476
          %v493 = vmul.f32 %v477, %v477
          %v494 = vmul.f32 %v478, %v478
          %v495 = vmul.f32 %v479, %v479
          %v496 = vmul.f32 %v480, %v480
          %v497 = vmul.f32 %v481, %v481
          %v498 = vmul.f32 %v482, %v482
          %v499 = vmul.f32 %v483, %v483
          %v500 = vmul.f32 %v484, %v484
          %v501 = vmul.f32 %v485, %v485
          %v502 = vmul.f32 %v486, %v486
          %503 = vadd.xlane.f32.xlu0 %v487
          %v504 = vpop.xlane.xlu0 %503
          %505 = vadd.xlane.f32.xlu0 %v488
          %v506 = vpop.xlane.xlu0 %505
          %507 = vadd.xlane.f32.xlu0 %v489
          %v508 = vpop.xlane.xlu0 %507
          %509 = vadd.xlane.f32.xlu0 %v490
          %v510 = vpop.xlane.xlu0 %509
          %511 = vadd.xlane.f32.xlu0 %v491
          %v512 = vpop.xlane.xlu0 %511
          %513 = vadd.xlane.f32.xlu0 %v492
          %v514 = vpop.xlane.xlu0 %513
          %515 = vadd.xlane.f32.xlu0 %v493
          %v516 = vpop.xlane.xlu0 %515
          %517 = vadd.xlane.f32.xlu0 %v494
          %v518 = vpop.xlane.xlu0 %517
          %519 = vadd.xlane.f32.xlu0 %v495
          %v520 = vpop.xlane.xlu0 %519
          %521 = vadd.xlane.f32.xlu0 %v496
          %v522 = vpop.xlane.xlu0 %521
          %523 = vadd.xlane.f32.xlu0 %v497
          %v524 = vpop.xlane.xlu0 %523
          %525 = vadd.xlane.f32.xlu0 %v498
          %v526 = vpop.xlane.xlu0 %525
          %527 = vadd.xlane.f32.xlu0 %v499
          %v528 = vpop.xlane.xlu0 %527
          %529 = vadd.xlane.f32.xlu0 %v500
          %v530 = vpop.xlane.xlu0 %529
          %531 = vadd.xlane.f32.xlu0 %v501
          %v532 = vpop.xlane.xlu0 %531
          %533 = vadd.xlane.f32.xlu0 %v502
          %v534 = vpop.xlane.xlu0 %533
          %v535 = vmul.f32 %v504, %v454
          %v536 = vmul.f32 %v506, %v454
          %v537 = vmul.f32 %v508, %v454
          %v538 = vmul.f32 %v510, %v454
          %v539 = vmul.f32 %v512, %v454
          %v540 = vmul.f32 %v514, %v454
          %v541 = vmul.f32 %v516, %v454
          %v542 = vmul.f32 %v518, %v454
          %v543 = vmul.f32 %v520, %v454
          %v544 = vmul.f32 %v522, %v454
          %v545 = vmul.f32 %v524, %v454
          %v546 = vmul.f32 %v526, %v454
          %v547 = vmul.f32 %v528, %v454
          %v548 = vmul.f32 %v530, %v454
          %v549 = vmul.f32 %v532, %v454
          %v550 = vmul.f32 %v534, %v454
          %v551 = vadd.f32 %v535, 1e-05
          %v552 = vadd.f32 %v536, 1e-05
          %v553 = vadd.f32 %v537, 1e-05
          %v554 = vadd.f32 %v538, 1e-05
          %v555 = vadd.f32 %v539, 1e-05
          %v556 = vadd.f32 %v540, 1e-05
          %v557 = vadd.f32 %v541, 1e-05
          %v558 = vadd.f32 %v542, 1e-05
          %v559 = vadd.f32 %v543, 1e-05
          %v560 = vadd.f32 %v544, 1e-05
          %v561 = vadd.f32 %v545, 1e-05
          %v562 = vadd.f32 %v546, 1e-05
          %v563 = vadd.f32 %v547, 1e-05
          %v564 = vadd.f32 %v548, 1e-05
          %v565 = vadd.f32 %v549, 1e-05
          %v566 = vadd.f32 %v550, 1e-05
          %v567 = vrsqrt.pop %v551
          %v568 = vmul.f32 %v567, %v551
          %v569 = vmul.f32 %v568, %v567
          %v570 = vmul.f32 0.5, %v569
          %v571 = vsub.f32 1.5, %v570
          %v572 = vmul.f32 %v567, %v571
          %vm573 = vweird.f32 %v551
          %vm574 = vweird.f32 %v567
          %vm575 = vmor %vm573, %vm574
          %v576 = vsel %vm575, %v567, %v572
          %v577 = vrsqrt.pop %v552
          %v578 = vmul.f32 %v577, %v552
          %v579 = vmul.f32 %v578, %v577
          %v580 = vmul.f32 0.5, %v579
          %v581 = vsub.f32 1.5, %v580
          %v582 = vmul.f32 %v577, %v581
          %vm583 = vweird.f32 %v552
          %vm584 = vweird.f32 %v577
          %vm585 = vmor %vm583, %vm584
          %v586 = vsel %vm585, %v577, %v582
          %v587 = vrsqrt.pop %v553
          %v588 = vmul.f32 %v587, %v553
          %v589 = vmul.f32 %v588, %v587
          %v590 = vmul.f32 0.5, %v589
          %v591 = vsub.f32 1.5, %v590
          %v592 = vmul.f32 %v587, %v591
          %vm593 = vweird.f32 %v553
          %vm594 = vweird.f32 %v587
          %vm595 = vmor %vm593, %vm594
          %v596 = vsel %vm595, %v587, %v592
          %v597 = vrsqrt.pop %v554
          %v598 = vmul.f32 %v597, %v554
          %v599 = vmul.f32 %v598, %v597
          %v600 = vmul.f32 0.5, %v599
          %v601 = vsub.f32 1.5, %v600
          %v602 = vmul.f32 %v597, %v601
          %vm603 = vweird.f32 %v554
          %vm604 = vweird.f32 %v597
          %vm605 = vmor %vm603, %vm604
          %v606 = vsel %vm605, %v597, %v602
          %v607 = vrsqrt.pop %v555
          %v608 = vmul.f32 %v607, %v555
          %v609 = vmul.f32 %v608, %v607
          %v610 = vmul.f32 0.5, %v609
          %v611 = vsub.f32 1.5, %v610
          %v612 = vmul.f32 %v607, %v611
          %vm613 = vweird.f32 %v555
          %vm614 = vweird.f32 %v607
          %vm615 = vmor %vm613, %vm614
          %v616 = vsel %vm615, %v607, %v612
          %v617 = vrsqrt.pop %v556
          %v618 = vmul.f32 %v617, %v556
          %v619 = vmul.f32 %v618, %v617
          %v620 = vmul.f32 0.5, %v619
          %v621 = vsub.f32 1.5, %v620
          %v622 = vmul.f32 %v617, %v621
          %vm623 = vweird.f32 %v556
          %vm624 = vweird.f32 %v617
          %vm625 = vmor %vm623, %vm624
          %v626 = vsel %vm625, %v617, %v622
          %v627 = vrsqrt.pop %v557
          %v628 = vmul.f32 %v627, %v557
          %v629 = vmul.f32 %v628, %v627
          %v630 = vmul.f32 0.5, %v629
          %v631 = vsub.f32 1.5, %v630
          %v632 = vmul.f32 %v627, %v631
          %vm633 = vweird.f32 %v557
          %vm634 = vweird.f32 %v627
          %vm635 = vmor %vm633, %vm634
          %v636 = vsel %vm635, %v627, %v632
          %v637 = vrsqrt.pop %v558
          %v638 = vmul.f32 %v637, %v558
          %v639 = vmul.f32 %v638, %v637
          %v640 = vmul.f32 0.5, %v639
          %v641 = vsub.f32 1.5, %v640
          %v642 = vmul.f32 %v637, %v641
          %vm643 = vweird.f32 %v558
          %vm644 = vweird.f32 %v637
          %vm645 = vmor %vm643, %vm644
          %v646 = vsel %vm645, %v637, %v642
          %v647 = vrsqrt.pop %v559
          %v648 = vmul.f32 %v647, %v559
          %v649 = vmul.f32 %v648, %v647
          %v650 = vmul.f32 0.5, %v649
          %v651 = vsub.f32 1.5, %v650
          %v652 = vmul.f32 %v647, %v651
          %vm653 = vweird.f32 %v559
          %vm654 = vweird.f32 %v647
          %vm655 = vmor %vm653, %vm654
          %v656 = vsel %vm655, %v647, %v652
          %v657 = vrsqrt.pop %v560
          %v658 = vmul.f32 %v657, %v560
          %v659 = vmul.f32 %v658, %v657
          %v660 = vmul.f32 0.5, %v659
          %v661 = vsub.f32 1.5, %v660
          %v662 = vmul.f32 %v657, %v661
          %vm663 = vweird.f32 %v560
          %vm664 = vweird.f32 %v657
          %vm665 = vmor %vm663, %vm664
          %v666 = vsel %vm665, %v657, %v662
          %v667 = vrsqrt.pop %v561
          %v668 = vmul.f32 %v667, %v561
          %v669 = vmul.f32 %v668, %v667
          %v670 = vmul.f32 0.5, %v669
          %v671 = vsub.f32 1.5, %v670
          %v672 = vmul.f32 %v667, %v671
          %vm673 = vweird.f32 %v561
          %vm674 = vweird.f32 %v667
          %vm675 = vmor %vm673, %vm674
          %v676 = vsel %vm675, %v667, %v672
          %v677 = vrsqrt.pop %v562
          %v678 = vmul.f32 %v677, %v562
          %v679 = vmul.f32 %v678, %v677
          %v680 = vmul.f32 0.5, %v679
          %v681 = vsub.f32 1.5, %v680
          %v682 = vmul.f32 %v677, %v681
          %vm683 = vweird.f32 %v562
          %vm684 = vweird.f32 %v677
          %vm685 = vmor %vm683, %vm684
          %v686 = vsel %vm685, %v677, %v682
          %v687 = vrsqrt.pop %v563
          %v688 = vmul.f32 %v687, %v563
          %v689 = vmul.f32 %v688, %v687
          %v690 = vmul.f32 0.5, %v689
          %v691 = vsub.f32 1.5, %v690
          %v692 = vmul.f32 %v687, %v691
          %vm693 = vweird.f32 %v563
          %vm694 = vweird.f32 %v687
          %vm695 = vmor %vm693, %vm694
          %v696 = vsel %vm695, %v687, %v692
          %v697 = vrsqrt.pop %v564
          %v698 = vmul.f32 %v697, %v564
          %v699 = vmul.f32 %v698, %v697
          %v700 = vmul.f32 0.5, %v699
          %v701 = vsub.f32 1.5, %v700
          %v702 = vmul.f32 %v697, %v701
          %vm703 = vweird.f32 %v564
          %vm704 = vweird.f32 %v697
          %vm705 = vmor %vm703, %vm704
          %v706 = vsel %vm705, %v697, %v702
          %v707 = vrsqrt.pop %v565
          %v708 = vmul.f32 %v707, %v565
          %v709 = vmul.f32 %v708, %v707
          %v710 = vmul.f32 0.5, %v709
          %v711 = vsub.f32 1.5, %v710
          %v712 = vmul.f32 %v707, %v711
          %vm713 = vweird.f32 %v565
          %vm714 = vweird.f32 %v707
          %vm715 = vmor %vm713, %vm714
          %v716 = vsel %vm715, %v707, %v712
          %v717 = vrsqrt.pop %v566
          %v718 = vmul.f32 %v717, %v566
          %v719 = vmul.f32 %v718, %v717
          %v720 = vmul.f32 0.5, %v719
          %v721 = vsub.f32 1.5, %v720
          %v722 = vmul.f32 %v717, %v721
          %vm723 = vweird.f32 %v566
          %vm724 = vweird.f32 %v717
          %vm725 = vmor %vm723, %vm724
          %v726 = vsel %vm725, %v717, %v722
          %v727 = vmul.f32 %v471, %v576
          %v728 = vmul.f32 %v472, %v586
          %v729 = vmul.f32 %v473, %v596
          %v730 = vmul.f32 %v474, %v606
          %v731 = vmul.f32 %v475, %v616
          %v732 = vmul.f32 %v476, %v626
          %v733 = vmul.f32 %v477, %v636
          %v734 = vmul.f32 %v478, %v646
          %v735 = vmul.f32 %v479, %v656
          %v736 = vmul.f32 %v480, %v666
          %v737 = vmul.f32 %v481, %v676
          %v738 = vmul.f32 %v482, %v686
          %v739 = vmul.f32 %v483, %v696
          %v740 = vmul.f32 %v484, %v706
          %v741 = vmul.f32 %v485, %v716
          %v742 = vmul.f32 %v486, %v726
          %v743 = vld [vmem:[%s1] sm:$0x1]
          %v745 = vperm.slane %v743, 0
          %v747 = vmul.f32 %v727, %v745
          %v748 = vmul.f32 %v728, %v745
          %v749 = vmul.f32 %v729, %v745
          %v750 = vmul.f32 %v730, %v745
          %v751 = vmul.f32 %v731, %v745
          %v752 = vmul.f32 %v732, %v745
          %v753 = vmul.f32 %v733, %v745
          %v754 = vmul.f32 %v734, %v745
          %v755 = vmul.f32 %v735, %v745
          %v756 = vmul.f32 %v736, %v745
          %v757 = vmul.f32 %v737, %v745
          %v758 = vmul.f32 %v738, %v745
          %v759 = vmul.f32 %v739, %v745
          %v760 = vmul.f32 %v740, %v745
          %v761 = vmul.f32 %v741, %v745
          %v762 = vmul.f32 %v742, %v745
          %v763 = vld [vmem:[%s2] sm:$0x1]
          %v765 = vperm.slane %v763, 0
          %v767 = vadd.f32 %v747, %v765
          %v768 = vadd.f32 %v748, %v765
          %v769 = vadd.f32 %v749, %v765
          %v770 = vadd.f32 %v750, %v765
          %v771 = vadd.f32 %v751, %v765
          %v772 = vadd.f32 %v752, %v765
          %v773 = vadd.f32 %v753, %v765
          %v774 = vadd.f32 %v754, %v765
          %v775 = vadd.f32 %v755, %v765
          %v776 = vadd.f32 %v756, %v765
          %v777 = vadd.f32 %v757, %v765
          %v778 = vadd.f32 %v758, %v765
          %v779 = vadd.f32 %v759, %v765
          %v780 = vadd.f32 %v760, %v765
          %v781 = vadd.f32 %v761, %v765
          %v782 = vadd.f32 %v762, %v765
          %783 = vst [vmem:[#allocation2] sm:$0xff] %v767
          %784 = vst [vmem:[#allocation2 + $0x8] sm:$0xff] %v768
          %785 = vst [vmem:[#allocation2 + $0x10] sm:$0xff] %v769
          %786 = vst [vmem:[#allocation2 + $0x18] sm:$0xff] %v770
          %787 = vst [vmem:[#allocation2 + $0x20] sm:$0xff] %v771
          %788 = vst [vmem:[#allocation2 + $0x28] sm:$0xff] %v772
          %789 = vst [vmem:[#allocation2 + $0x30] sm:$0xff] %v773
          %790 = vst [vmem:[#allocation2 + $0x38] sm:$0xff] %v774
          %791 = vst [vmem:[#allocation2 + $0x40] sm:$0xff] %v775
          %792 = vst [vmem:[#allocation2 + $0x48] sm:$0xff] %v776
          %793 = vst [vmem:[#allocation2 + $0x50] sm:$0xff] %v777
          %794 = vst [vmem:[#allocation2 + $0x58] sm:$0xff] %v778
          %795 = vst [vmem:[#allocation2 + $0x60] sm:$0xff] %v779
          %796 = vst [vmem:[#allocation2 + $0x68] sm:$0xff] %v780
          %797 = vst [vmem:[#allocation2 + $0x70] sm:$0xff] %v781
          %798 = vst [vmem:[#allocation2 + $0x78] sm:$0xff] %v782
          %799 = vst [vmem:[#allocation3] sm:$0xff] 0.0
          %800 = vst [vmem:[#allocation3 + $0x8] sm:$0xff] 0.0
          %801 = vst [vmem:[#allocation3 + $0x10] sm:$0xff] 0.0
          %802 = vst [vmem:[#allocation3 + $0x18] sm:$0xff] 0.0
          %803 = vst [vmem:[#allocation3 + $0x20] sm:$0xff] 0.0
          %804 = vst [vmem:[#allocation3 + $0x28] sm:$0xff] 0.0
          %805 = vst [vmem:[#allocation3 + $0x30] sm:$0xff] 0.0
          %806 = vst [vmem:[#allocation3 + $0x38] sm:$0xff] 0.0
          %807 = vst [vmem:[#allocation3 + $0x40] sm:$0xff] 0.0
          %808 = vst [vmem:[#allocation3 + $0x48] sm:$0xff] 0.0
          %809 = vst [vmem:[#allocation3 + $0x50] sm:$0xff] 0.0
          %810 = vst [vmem:[#allocation3 + $0x58] sm:$0xff] 0.0
          %811 = vst [vmem:[#allocation3 + $0x60] sm:$0xff] 0.0
          %812 = vst [vmem:[#allocation3 + $0x68] sm:$0xff] 0.0
          %813 = vst [vmem:[#allocation3 + $0x70] sm:$0xff] 0.0
          %814 = vst [vmem:[#allocation3 + $0x78] sm:$0xff] 0.0
        $region56: #{tpu_custom_call.1} parent=51 // pred_fallthru
          _
        %v815 = vld [vmem:[#allocation2] sm:$0xff]
        %v816 = vld [vmem:[#allocation2 + $0x8] sm:$0xff]
        %v817 = vld [vmem:[#allocation2 + $0x10] sm:$0xff]
        %v818 = vld [vmem:[#allocation2 + $0x18] sm:$0xff]
        %v819 = vld [vmem:[#allocation2 + $0x20] sm:$0xff]
        %v820 = vld [vmem:[#allocation2 + $0x28] sm:$0xff]
        %v821 = vld [vmem:[#allocation2 + $0x30] sm:$0xff]
        %v822 = vld [vmem:[#allocation2 + $0x38] sm:$0xff]
        %v823 = vld [vmem:[#allocation2 + $0x40] sm:$0xff]
        %v824 = vld [vmem:[#allocation2 + $0x48] sm:$0xff]
        %v825 = vld [vmem:[#allocation2 + $0x50] sm:$0xff]
        %v826 = vld [vmem:[#allocation2 + $0x58] sm:$0xff]
        %v827 = vld [vmem:[#allocation2 + $0x60] sm:$0xff]
        %v828 = vld [vmem:[#allocation2 + $0x68] sm:$0xff]
        %v829 = vld [vmem:[#allocation2 + $0x70] sm:$0xff]
        %v830 = vld [vmem:[#allocation2 + $0x78] sm:$0xff]
        %v831 = vld [vmem:[%s380] sm:$0xff]
        %v832 = vld [vmem:[%s380 + $0x8] sm:$0xff]
        %v833 = vld [vmem:[%s380 + $0x10] sm:$0xff]
        %v834 = vld [vmem:[%s380 + $0x18] sm:$0xff]
        %v835 = vld [vmem:[%s380 + $0x20] sm:$0xff]
        %v836 = vld [vmem:[%s380 + $0x28] sm:$0xff]
        %v837 = vld [vmem:[%s380 + $0x30] sm:$0xff]
        %v838 = vld [vmem:[%s380 + $0x38] sm:$0xff]
        %v839 = vld [vmem:[%s380 + $0x40] sm:$0xff]
        %v840 = vld [vmem:[%s380 + $0x48] sm:$0xff]
        %v841 = vld [vmem:[%s380 + $0x50] sm:$0xff]
        %v842 = vld [vmem:[%s380 + $0x58] sm:$0xff]
        %v843 = vld [vmem:[%s380 + $0x60] sm:$0xff]
        %v844 = vld [vmem:[%s380 + $0x68] sm:$0xff]
        %v845 = vld [vmem:[%s380 + $0x70] sm:$0xff]
        %v846 = vld [vmem:[%s380 + $0x78] sm:$0xff]
        %847 = vmatpush.msra.mxu0 %v846
        %848 = vmatpush.msra.mxu0 %v845
        %849 = vmatpush.msra.mxu0 %v844
        %850 = vmatpush.msra.mxu0 %v843
        %851 = vmatpush.msra.mxu0 %v842
        %852 = vmatpush.msra.mxu0 %v841
        %853 = vmatpush.msra.mxu0 %v840
        %854 = vmatpush.msra.mxu0 %v839
        %855 = vmatpush.msra.mxu0 %v838
        %856 = vmatpush.msra.mxu0 %v837
        %857 = vmatpush.msra.mxu0 %v836
        %858 = vmatpush.msra.mxu0 %v835
        %859 = vmatpush.msra.mxu0 %v834
        %860 = vmatpush.msra.mxu0 %v833
        %861 = vmatpush.msra.mxu0 %v832
        %862 = vmatpush.msra.mxu0 %v831
        %863 = vmatmul.f32.gmra.mxu0 %v815
        %v864 = vpop.f32.mrf.mxu0
        %v865 = vadd.f32 0.0, %v864
        %866 = vmatmul.f32.gmra.mxu0 %v816
        %v867 = vpop.f32.mrf.mxu0
        %v868 = vadd.f32 0.0, %v867
        %869 = vmatmul.f32.gmra.mxu0 %v817
        %v870 = vpop.f32.mrf.mxu0
        %v871 = vadd.f32 0.0, %v870
        %872 = vmatmul.f32.gmra.mxu0 %v818
        %v873 = vpop.f32.mrf.mxu0
        %v874 = vadd.f32 0.0, %v873
        %875 = vmatmul.f32.gmra.mxu0 %v819
        %v876 = vpop.f32.mrf.mxu0
        %v877 = vadd.f32 0.0, %v876
        %878 = vmatmul.f32.gmra.mxu0 %v820
        %v879 = vpop.f32.mrf.mxu0
        %v880 = vadd.f32 0.0, %v879
        %881 = vmatmul.f32.gmra.mxu0 %v821
        %v882 = vpop.f32.mrf.mxu0
        %v883 = vadd.f32 0.0, %v882
        %884 = vmatmul.f32.gmra.mxu0 %v822
        %v885 = vpop.f32.mrf.mxu0
        %v886 = vadd.f32 0.0, %v885
        %887 = vmatmul.f32.gmra.mxu0 %v823
        %v888 = vpop.f32.mrf.mxu0
        %v889 = vadd.f32 0.0, %v888
        %890 = vmatmul.f32.gmra.mxu0 %v824
        %v891 = vpop.f32.mrf.mxu0
        %v892 = vadd.f32 0.0, %v891
        %893 = vmatmul.f32.gmra.mxu0 %v825
        %v894 = vpop.f32.mrf.mxu0
        %v895 = vadd.f32 0.0, %v894
        %896 = vmatmul.f32.gmra.mxu0 %v826
        %v897 = vpop.f32.mrf.mxu0
        %v898 = vadd.f32 0.0, %v897
        %899 = vmatmul.f32.gmra.mxu0 %v827
        %v900 = vpop.f32.mrf.mxu0
        %v901 = vadd.f32 0.0, %v900
        %902 = vmatmul.f32.gmra.mxu0 %v828
        %v903 = vpop.f32.mrf.mxu0
        %v904 = vadd.f32 0.0, %v903
        %905 = vmatmul.f32.gmra.mxu0 %v829
        %v906 = vpop.f32.mrf.mxu0
        %v907 = vadd.f32 0.0, %v906
        %908 = vmatmul.f32.gmra.mxu0 %v830
        %v909 = vpop.f32.mrf.mxu0
        %v910 = vadd.f32 0.0, %v909
        %911 = vdwg.mxu0
        %v912 = vld [vmem:[%s385] sm:$0xff]
        %v913 = vld [vmem:[%s385 + $0x8] sm:$0xff]
        %v914 = vld [vmem:[%s385 + $0x10] sm:$0xff]
        %v915 = vld [vmem:[%s385 + $0x18] sm:$0xff]
        %v916 = vld [vmem:[%s385 + $0x20] sm:$0xff]
        %v917 = vld [vmem:[%s385 + $0x28] sm:$0xff]
        %v918 = vld [vmem:[%s385 + $0x30] sm:$0xff]
        %v919 = vld [vmem:[%s385 + $0x38] sm:$0xff]
        %v920 = vld [vmem:[%s385 + $0x40] sm:$0xff]
        %v921 = vld [vmem:[%s385 + $0x48] sm:$0xff]
        %v922 = vld [vmem:[%s385 + $0x50] sm:$0xff]
        %v923 = vld [vmem:[%s385 + $0x58] sm:$0xff]
        %v924 = vld [vmem:[%s385 + $0x60] sm:$0xff]
        %v925 = vld [vmem:[%s385 + $0x68] sm:$0xff]
        %v926 = vld [vmem:[%s385 + $0x70] sm:$0xff]
        %v927 = vld [vmem:[%s385 + $0x78] sm:$0xff]
        %928 = vmatpush.msra.mxu0 %v927
        %929 = vmatpush.msra.mxu0 %v926
        %930 = vmatpush.msra.mxu0 %v925
        %931 = vmatpush.msra.mxu0 %v924
        %932 = vmatpush.msra.mxu0 %v923
        %933 = vmatpush.msra.mxu0 %v922
        %934 = vmatpush.msra.mxu0 %v921
        %935 = vmatpush.msra.mxu0 %v920
        %936 = vmatpush.msra.mxu0 %v919
        %937 = vmatpush.msra.mxu0 %v918
        %938 = vmatpush.msra.mxu0 %v917
        %939 = vmatpush.msra.mxu0 %v916
        %940 = vmatpush.msra.mxu0 %v915
        %941 = vmatpush.msra.mxu0 %v914
        %942 = vmatpush.msra.mxu0 %v913
        %943 = vmatpush.msra.mxu0 %v912
        %944 = vmatmul.f32.gmra.mxu0 %v815
        %v945 = vpop.f32.mrf.mxu0
        %v946 = vadd.f32 0.0, %v945
        %947 = vmatmul.f32.gmra.mxu0 %v816
        %v948 = vpop.f32.mrf.mxu0
        %v949 = vadd.f32 0.0, %v948
        %950 = vmatmul.f32.gmra.mxu0 %v817
        %v951 = vpop.f32.mrf.mxu0
        %v952 = vadd.f32 0.0, %v951
        %953 = vmatmul.f32.gmra.mxu0 %v818
        %v954 = vpop.f32.mrf.mxu0
        %v955 = vadd.f32 0.0, %v954
        %956 = vmatmul.f32.gmra.mxu0 %v819
        %v957 = vpop.f32.mrf.mxu0
        %v958 = vadd.f32 0.0, %v957
        %959 = vmatmul.f32.gmra.mxu0 %v820
        %v960 = vpop.f32.mrf.mxu0
        %v961 = vadd.f32 0.0, %v960
        %962 = vmatmul.f32.gmra.mxu0 %v821
        %v963 = vpop.f32.mrf.mxu0
        %v964 = vadd.f32 0.0, %v963
        %965 = vmatmul.f32.gmra.mxu0 %v822
        %v966 = vpop.f32.mrf.mxu0
        %v967 = vadd.f32 0.0, %v966
        %968 = vmatmul.f32.gmra.mxu0 %v823
        %v969 = vpop.f32.mrf.mxu0
        %v970 = vadd.f32 0.0, %v969
        %971 = vmatmul.f32.gmra.mxu0 %v824
        %v972 = vpop.f32.mrf.mxu0
        %v973 = vadd.f32 0.0, %v972
        %974 = vmatmul.f32.gmra.mxu0 %v825
        %v975 = vpop.f32.mrf.mxu0
        %v976 = vadd.f32 0.0, %v975
        %977 = vmatmul.f32.gmra.mxu0 %v826
        %v978 = vpop.f32.mrf.mxu0
        %v979 = vadd.f32 0.0, %v978
        %980 = vmatmul.f32.gmra.mxu0 %v827
        %v981 = vpop.f32.mrf.mxu0
        %v982 = vadd.f32 0.0, %v981
        %983 = vmatmul.f32.gmra.mxu0 %v828
        %v984 = vpop.f32.mrf.mxu0
        %v985 = vadd.f32 0.0, %v984
        %986 = vmatmul.f32.gmra.mxu0 %v829
        %v987 = vpop.f32.mrf.mxu0
        %v988 = vadd.f32 0.0, %v987
        %989 = vmatmul.f32.gmra.mxu0 %v830
        %v990 = vpop.f32.mrf.mxu0
        %v991 = vadd.f32 0.0, %v990
        %992 = vdwg.mxu0
        %v993 = vld [vmem:[%s390] sm:$0xff]
        %v994 = vld [vmem:[%s390 + $0x8] sm:$0xff]
        %v995 = vld [vmem:[%s390 + $0x10] sm:$0xff]
        %v996 = vld [vmem:[%s390 + $0x18] sm:$0xff]
        %v997 = vld [vmem:[%s390 + $0x20] sm:$0xff]
        %v998 = vld [vmem:[%s390 + $0x28] sm:$0xff]
        %v999 = vld [vmem:[%s390 + $0x30] sm:$0xff]
        %v1000 = vld [vmem:[%s390 + $0x38] sm:$0xff]
        %v1001 = vld [vmem:[%s390 + $0x40] sm:$0xff]
        %v1002 = vld [vmem:[%s390 + $0x48] sm:$0xff]
        %v1003 = vld [vmem:[%s390 + $0x50] sm:$0xff]
        %v1004 = vld [vmem:[%s390 + $0x58] sm:$0xff]
        %v1005 = vld [vmem:[%s390 + $0x60] sm:$0xff]
        %v1006 = vld [vmem:[%s390 + $0x68] sm:$0xff]
        %v1007 = vld [vmem:[%s390 + $0x70] sm:$0xff]
        %v1008 = vld [vmem:[%s390 + $0x78] sm:$0xff]
        %1009 = vmatpush.msra.mxu0 %v1008
        %1010 = vmatpush.msra.mxu0 %v1007
        %1011 = vmatpush.msra.mxu0 %v1006
        %1012 = vmatpush.msra.mxu0 %v1005
        %1013 = vmatpush.msra.mxu0 %v1004
        %1014 = vmatpush.msra.mxu0 %v1003
        %1015 = vmatpush.msra.mxu0 %v1002
        %1016 = vmatpush.msra.mxu0 %v1001
        %1017 = vmatpush.msra.mxu0 %v1000
        %1018 = vmatpush.msra.mxu0 %v999
        %1019 = vmatpush.msra.mxu0 %v998
        %1020 = vmatpush.msra.mxu0 %v997
        %1021 = vmatpush.msra.mxu0 %v996
        %1022 = vmatpush.msra.mxu0 %v995
        %1023 = vmatpush.msra.mxu0 %v994
        %1024 = vmatpush.msra.mxu0 %v993
        %1025 = vmatmul.f32.gmra.mxu0 %v815
        %v1026 = vpop.f32.mrf.mxu0
        %v1027 = vadd.f32 0.0, %v1026
        %1028 = vmatmul.f32.gmra.mxu0 %v816
        %v1029 = vpop.f32.mrf.mxu0
        %v1030 = vadd.f32 0.0, %v1029
        %1031 = vmatmul.f32.gmra.mxu0 %v817
        %v1032 = vpop.f32.mrf.mxu0
        %v1033 = vadd.f32 0.0, %v1032
        %1034 = vmatmul.f32.gmra.mxu0 %v818
        %v1035 = vpop.f32.mrf.mxu0
        %v1036 = vadd.f32 0.0, %v1035
        %1037 = vmatmul.f32.gmra.mxu0 %v819
        %v1038 = vpop.f32.mrf.mxu0
        %v1039 = vadd.f32 0.0, %v1038
        %1040 = vmatmul.f32.gmra.mxu0 %v820
        %v1041 = vpop.f32.mrf.mxu0
        %v1042 = vadd.f32 0.0, %v1041
        %1043 = vmatmul.f32.gmra.mxu0 %v821
        %v1044 = vpop.f32.mrf.mxu0
        %v1045 = vadd.f32 0.0, %v1044
        %1046 = vmatmul.f32.gmra.mxu0 %v822
        %v1047 = vpop.f32.mrf.mxu0
        %v1048 = vadd.f32 0.0, %v1047
        %1049 = vmatmul.f32.gmra.mxu0 %v823
        %v1050 = vpop.f32.mrf.mxu0
        %v1051 = vadd.f32 0.0, %v1050
        %1052 = vmatmul.f32.gmra.mxu0 %v824
        %v1053 = vpop.f32.mrf.mxu0
        %v1054 = vadd.f32 0.0, %v1053
        %1055 = vmatmul.f32.gmra.mxu0 %v825
        %v1056 = vpop.f32.mrf.mxu0
        %v1057 = vadd.f32 0.0, %v1056
        %1058 = vmatmul.f32.gmra.mxu0 %v826
        %v1059 = vpop.f32.mrf.mxu0
        %v1060 = vadd.f32 0.0, %v1059
        %1061 = vmatmul.f32.gmra.mxu0 %v827
        %v1062 = vpop.f32.mrf.mxu0
        %v1063 = vadd.f32 0.0, %v1062
        %1064 = vmatmul.f32.gmra.mxu0 %v828
        %v1065 = vpop.f32.mrf.mxu0
        %v1066 = vadd.f32 0.0, %v1065
        %1067 = vmatmul.f32.gmra.mxu0 %v829
        %v1068 = vpop.f32.mrf.mxu0
        %v1069 = vadd.f32 0.0, %v1068
        %1070 = vmatmul.f32.gmra.mxu0 %v830
        %v1071 = vpop.f32.mrf.mxu0
        %v1072 = vadd.f32 0.0, %v1071
        %1073 = vdwg.mxu0
        %vm1074 = vcmask 523264
        %v1076 = vsel %vm1074, %v865, 0
        %v1079 = vsel %vm1074, %v868, 0
        %v1082 = vsel %vm1074, %v871, 0
        %v1085 = vsel %vm1074, %v874, 0
        %v1088 = vsel %vm1074, %v877, 0
        %v1091 = vsel %vm1074, %v880, 0
        %v1094 = vsel %vm1074, %v883, 0
        %v1097 = vsel %vm1074, %v886, 0
        %v1100 = vsel %vm1074, %v889, 0
        %v1103 = vsel %vm1074, %v892, 0
        %v1106 = vsel %vm1074, %v895, 0
        %v1109 = vsel %vm1074, %v898, 0
        %v1112 = vsel %vm1074, %v901, 0
        %v1115 = vsel %vm1074, %v904, 0
        %v1118 = vsel %vm1074, %v907, 0
        %v1121 = vsel %vm1074, %v910, 0
        %v1124 = vsel %vm1074, %v946, 0
        %v1127 = vsel %vm1074, %v949, 0
        %v1130 = vsel %vm1074, %v952, 0
        %v1133 = vsel %vm1074, %v955, 0
        %v1136 = vsel %vm1074, %v958, 0
        %v1139 = vsel %vm1074, %v961, 0
        %v1142 = vsel %vm1074, %v964, 0
        %v1145 = vsel %vm1074, %v967, 0
        %v1148 = vsel %vm1074, %v970, 0
        %v1151 = vsel %vm1074, %v973, 0
        %v1154 = vsel %vm1074, %v976, 0
        %v1157 = vsel %vm1074, %v979, 0
        %v1160 = vsel %vm1074, %v982, 0
        %v1163 = vsel %vm1074, %v985, 0
        %v1166 = vsel %vm1074, %v988, 0
        %v1169 = vsel %vm1074, %v991, 0
        %1171 = vmatpush.xpose.msra.mxu0 %v1169
        %1172 = vmatpush.xpose.msra.mxu0 %v1166
        %1173 = vmatpush.xpose.msra.mxu0 %v1163
        %1174 = vmatpush.xpose.msra.mxu0 %v1160
        %1175 = vmatpush.xpose.msra.mxu0 %v1157
        %1176 = vmatpush.xpose.msra.mxu0 %v1154
        %1177 = vmatpush.xpose.msra.mxu0 %v1151
        %1178 = vmatpush.xpose.msra.mxu0 %v1148
        %1179 = vmatpush.xpose.msra.mxu0 %v1145
        %1180 = vmatpush.xpose.msra.mxu0 %v1142
        %1181 = vmatpush.xpose.msra.mxu0 %v1139
        %1182 = vmatpush.xpose.msra.mxu0 %v1136
        %1183 = vmatpush.xpose.msra.mxu0 %v1133
        %1184 = vmatpush.xpose.msra.mxu0 %v1130
        %1185 = vmatpush.xpose.msra.mxu0 %v1127
        %1186 = vmatpush.xpose.msra.mxu0 %v1124
        %1187 = vmatmul.f32.gmra.mxu0 %v1076
        %v1188 = vpop.f32.mrf.mxu0
        %v1189 = vadd.f32 0.0, %v1188
        %1190 = vmatmul.f32.gmra.mxu0 %v1079
        %v1191 = vpop.f32.mrf.mxu0
        %v1192 = vadd.f32 0.0, %v1191
        %1193 = vmatmul.f32.gmra.mxu0 %v1082
        %v1194 = vpop.f32.mrf.mxu0
        %v1195 = vadd.f32 0.0, %v1194
        %1196 = vmatmul.f32.gmra.mxu0 %v1085
        %v1197 = vpop.f32.mrf.mxu0
        %v1198 = vadd.f32 0.0, %v1197
        %1199 = vmatmul.f32.gmra.mxu0 %v1088
        %v1200 = vpop.f32.mrf.mxu0
        %v1201 = vadd.f32 0.0, %v1200
        %1202 = vmatmul.f32.gmra.mxu0 %v1091
        %v1203 = vpop.f32.mrf.mxu0
        %v1204 = vadd.f32 0.0, %v1203
        %1205 = vmatmul.f32.gmra.mxu0 %v1094
        %v1206 = vpop.f32.mrf.mxu0
        %v1207 = vadd.f32 0.0, %v1206
        %1208 = vmatmul.f32.gmra.mxu0 %v1097
        %v1209 = vpop.f32.mrf.mxu0
        %v1210 = vadd.f32 0.0, %v1209
        %1211 = vmatmul.f32.gmra.mxu0 %v1100
        %v1212 = vpop.f32.mrf.mxu0
        %v1213 = vadd.f32 0.0, %v1212
        %1214 = vmatmul.f32.gmra.mxu0 %v1103
        %v1215 = vpop.f32.mrf.mxu0
        %v1216 = vadd.f32 0.0, %v1215
        %1217 = vmatmul.f32.gmra.mxu0 %v1106
        %v1218 = vpop.f32.mrf.mxu0
        %v1219 = vadd.f32 0.0, %v1218
        %1220 = vmatmul.f32.gmra.mxu0 %v1109
        %v1221 = vpop.f32.mrf.mxu0
        %v1222 = vadd.f32 0.0, %v1221
        %1223 = vmatmul.f32.gmra.mxu0 %v1112
        %v1224 = vpop.f32.mrf.mxu0
        %v1225 = vadd.f32 0.0, %v1224
        %1226 = vmatmul.f32.gmra.mxu0 %v1115
        %v1227 = vpop.f32.mrf.mxu0
        %v1228 = vadd.f32 0.0, %v1227
        %1229 = vmatmul.f32.gmra.mxu0 %v1118
        %v1230 = vpop.f32.mrf.mxu0
        %v1231 = vadd.f32 0.0, %v1230
        %1232 = vmatmul.f32.gmra.mxu0 %v1121
        %v1233 = vpop.f32.mrf.mxu0
        %v1234 = vadd.f32 0.0, %v1233
        %1235 = vdwg.mxu0
        %v1236 = vmul.f32 %v1189, 0.125
        %v1237 = vmul.f32 %v1192, 0.125
        %v1238 = vmul.f32 %v1195, 0.125
        %v1239 = vmul.f32 %v1198, 0.125
        %v1240 = vmul.f32 %v1201, 0.125
        %v1241 = vmul.f32 %v1204, 0.125
        %v1242 = vmul.f32 %v1207, 0.125
        %v1243 = vmul.f32 %v1210, 0.125
        %v1244 = vmul.f32 %v1213, 0.125
        %v1245 = vmul.f32 %v1216, 0.125
        %v1246 = vmul.f32 %v1219, 0.125
        %v1247 = vmul.f32 %v1222, 0.125
        %v1248 = vmul.f32 %v1225, 0.125
        %v1249 = vmul.f32 %v1228, 0.125
        %v1250 = vmul.f32 %v1231, 0.125
        %v1251 = vmul.f32 %v1234, 0.125
        %1252 = vmax.xlane.f32.xlu0 %v1236
        %v1253 = vpop.xlane.xlu0 %1252
        %1254 = vmax.xlane.f32.xlu0 %v1237
        %v1255 = vpop.xlane.xlu0 %1254
        %1256 = vmax.xlane.f32.xlu0 %v1238
        %v1257 = vpop.xlane.xlu0 %1256
        %1258 = vmax.xlane.f32.xlu0 %v1239
        %v1259 = vpop.xlane.xlu0 %1258
        %1260 = vmax.xlane.f32.xlu0 %v1240
        %v1261 = vpop.xlane.xlu0 %1260
        %1262 = vmax.xlane.f32.xlu0 %v1241
        %v1263 = vpop.xlane.xlu0 %1262
        %1264 = vmax.xlane.f32.xlu0 %v1242
        %v1265 = vpop.xlane.xlu0 %1264
        %1266 = vmax.xlane.f32.xlu0 %v1243
        %v1267 = vpop.xlane.xlu0 %1266
        %1268 = vmax.xlane.f32.xlu0 %v1244
        %v1269 = vpop.xlane.xlu0 %1268
        %1270 = vmax.xlane.f32.xlu0 %v1245
        %v1271 = vpop.xlane.xlu0 %1270
        %1272 = vmax.xlane.f32.xlu0 %v1246
        %v1273 = vpop.xlane.xlu0 %1272
        %1274 = vmax.xlane.f32.xlu0 %v1247
        %v1275 = vpop.xlane.xlu0 %1274
        %1276 = vmax.xlane.f32.xlu0 %v1248
        %v1277 = vpop.xlane.xlu0 %1276
        %1278 = vmax.xlane.f32.xlu0 %v1249
        %v1279 = vpop.xlane.xlu0 %1278
        %1280 = vmax.xlane.f32.xlu0 %v1250
        %v1281 = vpop.xlane.xlu0 %1280
        %1282 = vmax.xlane.f32.xlu0 %v1251
        %v1283 = vpop.xlane.xlu0 %1282
        %v1284 = vsub.f32 %v1236, %v1253
        %v1285 = vsub.f32 %v1237, %v1255
        %v1286 = vsub.f32 %v1238, %v1257
        %v1287 = vsub.f32 %v1239, %v1259
        %v1288 = vsub.f32 %v1240, %v1261
        %v1289 = vsub.f32 %v1241, %v1263
        %v1290 = vsub.f32 %v1242, %v1265
        %v1291 = vsub.f32 %v1243, %v1267
        %v1292 = vsub.f32 %v1244, %v1269
        %v1293 = vsub.f32 %v1245, %v1271
        %v1294 = vsub.f32 %v1246, %v1273
        %v1295 = vsub.f32 %v1247, %v1275
        %v1296 = vsub.f32 %v1248, %v1277
        %v1297 = vsub.f32 %v1249, %v1279
        %v1298 = vsub.f32 %v1250, %v1281
        %v1299 = vsub.f32 %v1251, %v1283
        %v1300 = vmul.f32 %v1284, 1.442695
        %v1301 = vpow.pop %v1300
        %v1302 = vmul.f32 %v1285, 1.442695
        %v1303 = vpow.pop %v1302
        %v1304 = vmul.f32 %v1286, 1.442695
        %v1305 = vpow.pop %v1304
        %v1306 = vmul.f32 %v1287, 1.442695
        %v1307 = vpow.pop %v1306
        %v1308 = vmul.f32 %v1288, 1.442695
        %v1309 = vpow.pop %v1308
        %v1310 = vmul.f32 %v1289, 1.442695
        %v1311 = vpow.pop %v1310
        %v1312 = vmul.f32 %v1290, 1.442695
        %v1313 = vpow.pop %v1312
        %v1314 = vmul.f32 %v1291, 1.442695
        %v1315 = vpow.pop %v1314
        %v1316 = vmul.f32 %v1292, 1.442695
        %v1317 = vpow.pop %v1316
        %v1318 = vmul.f32 %v1293, 1.442695
        %v1319 = vpow.pop %v1318
        %v1320 = vmul.f32 %v1294, 1.442695
        %v1321 = vpow.pop %v1320
        %v1322 = vmul.f32 %v1295, 1.442695
        %v1323 = vpow.pop %v1322
        %v1324 = vmul.f32 %v1296, 1.442695
        %v1325 = vpow.pop %v1324
        %v1326 = vmul.f32 %v1297, 1.442695
        %v1327 = vpow.pop %v1326
        %v1328 = vmul.f32 %v1298, 1.442695
        %v1329 = vpow.pop %v1328
        %v1330 = vmul.f32 %v1299, 1.442695
        %v1331 = vpow.pop %v1330
        %1332 = vadd.xlane.f32.xlu0 %v1301
        %v1333 = vpop.xlane.xlu0 %1332
        %1334 = vadd.xlane.f32.xlu0 %v1303
        %v1335 = vpop.xlane.xlu0 %1334
        %1336 = vadd.xlane.f32.xlu0 %v1305
        %v1337 = vpop.xlane.xlu0 %1336
        %1338 = vadd.xlane.f32.xlu0 %v1307
        %v1339 = vpop.xlane.xlu0 %1338
        %1340 = vadd.xlane.f32.xlu0 %v1309
        %v1341 = vpop.xlane.xlu0 %1340
        %1342 = vadd.xlane.f32.xlu0 %v1311
        %v1343 = vpop.xlane.xlu0 %1342
        %1344 = vadd.xlane.f32.xlu0 %v1313
        %v1345 = vpop.xlane.xlu0 %1344
        %1346 = vadd.xlane.f32.xlu0 %v1315
        %v1347 = vpop.xlane.xlu0 %1346
        %1348 = vadd.xlane.f32.xlu0 %v1317
        %v1349 = vpop.xlane.xlu0 %1348
        %1350 = vadd.xlane.f32.xlu0 %v1319
        %v1351 = vpop.xlane.xlu0 %1350
        %1352 = vadd.xlane.f32.xlu0 %v1321
        %v1353 = vpop.xlane.xlu0 %1352
        %1354 = vadd.xlane.f32.xlu0 %v1323
        %v1355 = vpop.xlane.xlu0 %1354
        %1356 = vadd.xlane.f32.xlu0 %v1325
        %v1357 = vpop.xlane.xlu0 %1356
        %1358 = vadd.xlane.f32.xlu0 %v1327
        %v1359 = vpop.xlane.xlu0 %1358
        %1360 = vadd.xlane.f32.xlu0 %v1329
        %v1361 = vpop.xlane.xlu0 %1360
        %1362 = vadd.xlane.f32.xlu0 %v1331
        %v1363 = vpop.xlane.xlu0 %1362
        %v1364 = vrcp.pop %v1333
        %v1365 = vmul.f32 %v1333, %v1364
        %v1366 = vsub.f32 1.0, %v1365
        %v1367 = vmul.f32 %v1364, %v1366
        %v1368 = vadd.f32 %v1364, %v1367
        %vm1369 = vweird.f32 %v1333
        %vm1370 = vweird.f32 %v1364
        %vm1371 = vmor %vm1369, %vm1370
        %v1372 = vsel %vm1371, %v1364, %v1368
        %v1373 = vand.u32 2147483647, %v1333
        %vm1374 = vcmp.eq.f32.partialorder %v1373, 8.507059e+37
        %v1375 = vand.u32 %v1333, 2147483648
        %v1376 = vor.u32 1.1754944e-38, %v1375
        %v1377 = vsel %vm1374, %v1376, %v1372
        %v1378 = vmul.f32 %v1301, %v1377
        %v1379 = vrcp.pop %v1335
        %v1380 = vmul.f32 %v1335, %v1379
        %v1381 = vsub.f32 1.0, %v1380
        %v1382 = vmul.f32 %v1379, %v1381
        %v1383 = vadd.f32 %v1379, %v1382
        %vm1384 = vweird.f32 %v1335
        %vm1385 = vweird.f32 %v1379
        %vm1386 = vmor %vm1384, %vm1385
        %v1387 = vsel %vm1386, %v1379, %v1383
        %v1388 = vand.u32 2147483647, %v1335
        %vm1389 = vcmp.eq.f32.partialorder %v1388, 8.507059e+37
        %v1390 = vand.u32 %v1335, 2147483648
        %v1391 = vor.u32 1.1754944e-38, %v1390
        %v1392 = vsel %vm1389, %v1391, %v1387
        %v1393 = vmul.f32 %v1303, %v1392
        %v1394 = vrcp.pop %v1337
        %v1395 = vmul.f32 %v1337, %v1394
        %v1396 = vsub.f32 1.0, %v1395
        %v1397 = vmul.f32 %v1394, %v1396
        %v1398 = vadd.f32 %v1394, %v1397
        %vm1399 = vweird.f32 %v1337
        %vm1400 = vweird.f32 %v1394
        %vm1401 = vmor %vm1399, %vm1400
        %v1402 = vsel %vm1401, %v1394, %v1398
        %v1403 = vand.u32 2147483647, %v1337
        %vm1404 = vcmp.eq.f32.partialorder %v1403, 8.507059e+37
        %v1405 = vand.u32 %v1337, 2147483648
        %v1406 = vor.u32 1.1754944e-38, %v1405
        %v1407 = vsel %vm1404, %v1406, %v1402
        %v1408 = vmul.f32 %v1305, %v1407
        %v1409 = vrcp.pop %v1339
        %v1410 = vmul.f32 %v1339, %v1409
        %v1411 = vsub.f32 1.0, %v1410
        %v1412 = vmul.f32 %v1409, %v1411
        %v1413 = vadd.f32 %v1409, %v1412
        %vm1414 = vweird.f32 %v1339
        %vm1415 = vweird.f32 %v1409
        %vm1416 = vmor %vm1414, %vm1415
        %v1417 = vsel %vm1416, %v1409, %v1413
        %v1418 = vand.u32 2147483647, %v1339
        %vm1419 = vcmp.eq.f32.partialorder %v1418, 8.507059e+37
        %v1420 = vand.u32 %v1339, 2147483648
        %v1421 = vor.u32 1.1754944e-38, %v1420
        %v1422 = vsel %vm1419, %v1421, %v1417
        %v1423 = vmul.f32 %v1307, %v1422
        %v1424 = vrcp.pop %v1341
        %v1425 = vmul.f32 %v1341, %v1424
        %v1426 = vsub.f32 1.0, %v1425
        %v1427 = vmul.f32 %v1424, %v1426
        %v1428 = vadd.f32 %v1424, %v1427
        %vm1429 = vweird.f32 %v1341
        %vm1430 = vweird.f32 %v1424
        %vm1431 = vmor %vm1429, %vm1430
        %v1432 = vsel %vm1431, %v1424, %v1428
        %v1433 = vand.u32 2147483647, %v1341
        %vm1434 = vcmp.eq.f32.partialorder %v1433, 8.507059e+37
        %v1435 = vand.u32 %v1341, 2147483648
        %v1436 = vor.u32 1.1754944e-38, %v1435
        %v1437 = vsel %vm1434, %v1436, %v1432
        %v1438 = vmul.f32 %v1309, %v1437
        %v1439 = vrcp.pop %v1343
        %v1440 = vmul.f32 %v1343, %v1439
        %v1441 = vsub.f32 1.0, %v1440
        %v1442 = vmul.f32 %v1439, %v1441
        %v1443 = vadd.f32 %v1439, %v1442
        %vm1444 = vweird.f32 %v1343
        %vm1445 = vweird.f32 %v1439
        %vm1446 = vmor %vm1444, %vm1445
        %v1447 = vsel %vm1446, %v1439, %v1443
        %v1448 = vand.u32 2147483647, %v1343
        %vm1449 = vcmp.eq.f32.partialorder %v1448, 8.507059e+37
        %v1450 = vand.u32 %v1343, 2147483648
        %v1451 = vor.u32 1.1754944e-38, %v1450
        %v1452 = vsel %vm1449, %v1451, %v1447
        %v1453 = vmul.f32 %v1311, %v1452
        %v1454 = vrcp.pop %v1345
        %v1455 = vmul.f32 %v1345, %v1454
        %v1456 = vsub.f32 1.0, %v1455
        %v1457 = vmul.f32 %v1454, %v1456
        %v1458 = vadd.f32 %v1454, %v1457
        %vm1459 = vweird.f32 %v1345
        %vm1460 = vweird.f32 %v1454
        %vm1461 = vmor %vm1459, %vm1460
        %v1462 = vsel %vm1461, %v1454, %v1458
        %v1463 = vand.u32 2147483647, %v1345
        %vm1464 = vcmp.eq.f32.partialorder %v1463, 8.507059e+37
        %v1465 = vand.u32 %v1345, 2147483648
        %v1466 = vor.u32 1.1754944e-38, %v1465
        %v1467 = vsel %vm1464, %v1466, %v1462
        %v1468 = vmul.f32 %v1313, %v1467
        %v1469 = vrcp.pop %v1347
        %v1470 = vmul.f32 %v1347, %v1469
        %v1471 = vsub.f32 1.0, %v1470
        %v1472 = vmul.f32 %v1469, %v1471
        %v1473 = vadd.f32 %v1469, %v1472
        %vm1474 = vweird.f32 %v1347
        %vm1475 = vweird.f32 %v1469
        %vm1476 = vmor %vm1474, %vm1475
        %v1477 = vsel %vm1476, %v1469, %v1473
        %v1478 = vand.u32 2147483647, %v1347
        %vm1479 = vcmp.eq.f32.partialorder %v1478, 8.507059e+37
        %v1480 = vand.u32 %v1347, 2147483648
        %v1481 = vor.u32 1.1754944e-38, %v1480
        %v1482 = vsel %vm1479, %v1481, %v1477
        %v1483 = vmul.f32 %v1315, %v1482
        %v1484 = vrcp.pop %v1349
        %v1485 = vmul.f32 %v1349, %v1484
        %v1486 = vsub.f32 1.0, %v1485
        %v1487 = vmul.f32 %v1484, %v1486
        %v1488 = vadd.f32 %v1484, %v1487
        %vm1489 = vweird.f32 %v1349
        %vm1490 = vweird.f32 %v1484
        %vm1491 = vmor %vm1489, %vm1490
        %v1492 = vsel %vm1491, %v1484, %v1488
        %v1493 = vand.u32 2147483647, %v1349
        %vm1494 = vcmp.eq.f32.partialorder %v1493, 8.507059e+37
        %v1495 = vand.u32 %v1349, 2147483648
        %v1496 = vor.u32 1.1754944e-38, %v1495
        %v1497 = vsel %vm1494, %v1496, %v1492
        %v1498 = vmul.f32 %v1317, %v1497
        %v1499 = vrcp.pop %v1351
        %v1500 = vmul.f32 %v1351, %v1499
        %v1501 = vsub.f32 1.0, %v1500
        %v1502 = vmul.f32 %v1499, %v1501
        %v1503 = vadd.f32 %v1499, %v1502
        %vm1504 = vweird.f32 %v1351
        %vm1505 = vweird.f32 %v1499
        %vm1506 = vmor %vm1504, %vm1505
        %v1507 = vsel %vm1506, %v1499, %v1503
        %v1508 = vand.u32 2147483647, %v1351
        %vm1509 = vcmp.eq.f32.partialorder %v1508, 8.507059e+37
        %v1510 = vand.u32 %v1351, 2147483648
        %v1511 = vor.u32 1.1754944e-38, %v1510
        %v1512 = vsel %vm1509, %v1511, %v1507
        %v1513 = vmul.f32 %v1319, %v1512
        %v1514 = vrcp.pop %v1353
        %v1515 = vmul.f32 %v1353, %v1514
        %v1516 = vsub.f32 1.0, %v1515
        %v1517 = vmul.f32 %v1514, %v1516
        %v1518 = vadd.f32 %v1514, %v1517
        %vm1519 = vweird.f32 %v1353
        %vm1520 = vweird.f32 %v1514
        %vm1521 = vmor %vm1519, %vm1520
        %v1522 = vsel %vm1521, %v1514, %v1518
        %v1523 = vand.u32 2147483647, %v1353
        %vm1524 = vcmp.eq.f32.partialorder %v1523, 8.507059e+37
        %v1525 = vand.u32 %v1353, 2147483648
        %v1526 = vor.u32 1.1754944e-38, %v1525
        %v1527 = vsel %vm1524, %v1526, %v1522
        %v1528 = vmul.f32 %v1321, %v1527
        %v1529 = vrcp.pop %v1355
        %v1530 = vmul.f32 %v1355, %v1529
        %v1531 = vsub.f32 1.0, %v1530
        %v1532 = vmul.f32 %v1529, %v1531
        %v1533 = vadd.f32 %v1529, %v1532
        %vm1534 = vweird.f32 %v1355
        %vm1535 = vweird.f32 %v1529
        %vm1536 = vmor %vm1534, %vm1535
        %v1537 = vsel %vm1536, %v1529, %v1533
        %v1538 = vand.u32 2147483647, %v1355
        %vm1539 = vcmp.eq.f32.partialorder %v1538, 8.507059e+37
        %v1540 = vand.u32 %v1355, 2147483648
        %v1541 = vor.u32 1.1754944e-38, %v1540
        %v1542 = vsel %vm1539, %v1541, %v1537
        %v1543 = vmul.f32 %v1323, %v1542
        %v1544 = vrcp.pop %v1357
        %v1545 = vmul.f32 %v1357, %v1544
        %v1546 = vsub.f32 1.0, %v1545
        %v1547 = vmul.f32 %v1544, %v1546
        %v1548 = vadd.f32 %v1544, %v1547
        %vm1549 = vweird.f32 %v1357
        %vm1550 = vweird.f32 %v1544
        %vm1551 = vmor %vm1549, %vm1550
        %v1552 = vsel %vm1551, %v1544, %v1548
        %v1553 = vand.u32 2147483647, %v1357
        %vm1554 = vcmp.eq.f32.partialorder %v1553, 8.507059e+37
        %v1555 = vand.u32 %v1357, 2147483648
        %v1556 = vor.u32 1.1754944e-38, %v1555
        %v1557 = vsel %vm1554, %v1556, %v1552
        %v1558 = vmul.f32 %v1325, %v1557
        %v1559 = vrcp.pop %v1359
        %v1560 = vmul.f32 %v1359, %v1559
        %v1561 = vsub.f32 1.0, %v1560
        %v1562 = vmul.f32 %v1559, %v1561
        %v1563 = vadd.f32 %v1559, %v1562
        %vm1564 = vweird.f32 %v1359
        %vm1565 = vweird.f32 %v1559
        %vm1566 = vmor %vm1564, %vm1565
        %v1567 = vsel %vm1566, %v1559, %v1563
        %v1568 = vand.u32 2147483647, %v1359
        %vm1569 = vcmp.eq.f32.partialorder %v1568, 8.507059e+37
        %v1570 = vand.u32 %v1359, 2147483648
        %v1571 = vor.u32 1.1754944e-38, %v1570
        %v1572 = vsel %vm1569, %v1571, %v1567
        %v1573 = vmul.f32 %v1327, %v1572
        %v1574 = vrcp.pop %v1361
        %v1575 = vmul.f32 %v1361, %v1574
        %v1576 = vsub.f32 1.0, %v1575
        %v1577 = vmul.f32 %v1574, %v1576
        %v1578 = vadd.f32 %v1574, %v1577
        %vm1579 = vweird.f32 %v1361
        %vm1580 = vweird.f32 %v1574
        %vm1581 = vmor %vm1579, %vm1580
        %v1582 = vsel %vm1581, %v1574, %v1578
        %v1583 = vand.u32 2147483647, %v1361
        %vm1584 = vcmp.eq.f32.partialorder %v1583, 8.507059e+37
        %v1585 = vand.u32 %v1361, 2147483648
        %v1586 = vor.u32 1.1754944e-38, %v1585
        %v1587 = vsel %vm1584, %v1586, %v1582
        %v1588 = vmul.f32 %v1329, %v1587
        %v1589 = vrcp.pop %v1363
        %v1590 = vmul.f32 %v1363, %v1589
        %v1591 = vsub.f32 1.0, %v1590
        %v1592 = vmul.f32 %v1589, %v1591
        %v1593 = vadd.f32 %v1589, %v1592
        %vm1594 = vweird.f32 %v1363
        %vm1595 = vweird.f32 %v1589
        %vm1596 = vmor %vm1594, %vm1595
        %v1597 = vsel %vm1596, %v1589, %v1593
        %v1598 = vand.u32 2147483647, %v1363
        %vm1599 = vcmp.eq.f32.partialorder %v1598, 8.507059e+37
        %v1600 = vand.u32 %v1363, 2147483648
        %v1601 = vor.u32 1.1754944e-38, %v1600
        %v1602 = vsel %vm1599, %v1601, %v1597
        %v1603 = vmul.f32 %v1331, %v1602
        %1604 = vmatpush.msra.mxu0 %v1072
        %1605 = vmatpush.msra.mxu0 %v1069
        %1606 = vmatpush.msra.mxu0 %v1066
        %1607 = vmatpush.msra.mxu0 %v1063
        %1608 = vmatpush.msra.mxu0 %v1060
        %1609 = vmatpush.msra.mxu0 %v1057
        %1610 = vmatpush.msra.mxu0 %v1054
        %1611 = vmatpush.msra.mxu0 %v1051
        %1612 = vmatpush.msra.mxu0 %v1048
        %1613 = vmatpush.msra.mxu0 %v1045
        %1614 = vmatpush.msra.mxu0 %v1042
        %1615 = vmatpush.msra.mxu0 %v1039
        %1616 = vmatpush.msra.mxu0 %v1036
        %1617 = vmatpush.msra.mxu0 %v1033
        %1618 = vmatpush.msra.mxu0 %v1030
        %1619 = vmatpush.msra.mxu0 %v1027
        %1620 = vmatmul.f32.gmra.mxu0 %v1378
        %v1621 = vpop.f32.mrf.mxu0
        %v1622 = vadd.f32 0.0, %v1621
        %1623 = vmatmul.f32.gmra.mxu0 %v1393
        %v1624 = vpop.f32.mrf.mxu0
        %v1625 = vadd.f32 0.0, %v1624
        %1626 = vmatmul.f32.gmra.mxu0 %v1408
        %v1627 = vpop.f32.mrf.mxu0
        %v1628 = vadd.f32 0.0, %v1627
        %1629 = vmatmul.f32.gmra.mxu0 %v1423
        %v1630 = vpop.f32.mrf.mxu0
        %v1631 = vadd.f32 0.0, %v1630
        %1632 = vmatmul.f32.gmra.mxu0 %v1438
        %v1633 = vpop.f32.mrf.mxu0
        %v1634 = vadd.f32 0.0, %v1633
        %1635 = vmatmul.f32.gmra.mxu0 %v1453
        %v1636 = vpop.f32.mrf.mxu0
        %v1637 = vadd.f32 0.0, %v1636
        %1638 = vmatmul.f32.gmra.mxu0 %v1468
        %v1639 = vpop.f32.mrf.mxu0
        %v1640 = vadd.f32 0.0, %v1639
        %1641 = vmatmul.f32.gmra.mxu0 %v1483
        %v1642 = vpop.f32.mrf.mxu0
        %v1643 = vadd.f32 0.0, %v1642
        %1644 = vmatmul.f32.gmra.mxu0 %v1498
        %v1645 = vpop.f32.mrf.mxu0
        %v1646 = vadd.f32 0.0, %v1645
        %1647 = vmatmul.f32.gmra.mxu0 %v1513
        %v1648 = vpop.f32.mrf.mxu0
        %v1649 = vadd.f32 0.0, %v1648
        %1650 = vmatmul.f32.gmra.mxu0 %v1528
        %v1651 = vpop.f32.mrf.mxu0
        %v1652 = vadd.f32 0.0, %v1651
        %1653 = vmatmul.f32.gmra.mxu0 %v1543
        %v1654 = vpop.f32.mrf.mxu0
        %v1655 = vadd.f32 0.0, %v1654
        %1656 = vmatmul.f32.gmra.mxu0 %v1558
        %v1657 = vpop.f32.mrf.mxu0
        %v1658 = vadd.f32 0.0, %v1657
        %1659 = vmatmul.f32.gmra.mxu0 %v1573
        %v1660 = vpop.f32.mrf.mxu0
        %v1661 = vadd.f32 0.0, %v1660
        %1662 = vmatmul.f32.gmra.mxu0 %v1588
        %v1663 = vpop.f32.mrf.mxu0
        %v1664 = vadd.f32 0.0, %v1663
        %1665 = vmatmul.f32.gmra.mxu0 %v1603
        %v1666 = vpop.f32.mrf.mxu0
        %v1667 = vadd.f32 0.0, %v1666
        %1668 = vdwg.mxu0
        %v1669 = vld [vmem:[#allocation3] sm:$0xff]
        %v1670 = vld [vmem:[#allocation3 + $0x8] sm:$0xff]
        %v1671 = vld [vmem:[#allocation3 + $0x10] sm:$0xff]
        %v1672 = vld [vmem:[#allocation3 + $0x18] sm:$0xff]
        %v1673 = vld [vmem:[#allocation3 + $0x20] sm:$0xff]
        %v1674 = vld [vmem:[#allocation3 + $0x28] sm:$0xff]
        %v1675 = vld [vmem:[#allocation3 + $0x30] sm:$0xff]
        %v1676 = vld [vmem:[#allocation3 + $0x38] sm:$0xff]
        %v1677 = vld [vmem:[#allocation3 + $0x40] sm:$0xff]
        %v1678 = vld [vmem:[#allocation3 + $0x48] sm:$0xff]
        %v1679 = vld [vmem:[#allocation3 + $0x50] sm:$0xff]
        %v1680 = vld [vmem:[#allocation3 + $0x58] sm:$0xff]
        %v1681 = vld [vmem:[#allocation3 + $0x60] sm:$0xff]
        %v1682 = vld [vmem:[#allocation3 + $0x68] sm:$0xff]
        %v1683 = vld [vmem:[#allocation3 + $0x70] sm:$0xff]
        %v1684 = vld [vmem:[#allocation3 + $0x78] sm:$0xff]
        %v1685 = vld [vmem:[%s395] sm:$0xff]
        %v1686 = vld [vmem:[%s395 + $0x8] sm:$0xff]
        %v1687 = vld [vmem:[%s395 + $0x10] sm:$0xff]
        %v1688 = vld [vmem:[%s395 + $0x18] sm:$0xff]
        %v1689 = vld [vmem:[%s395 + $0x20] sm:$0xff]
        %v1690 = vld [vmem:[%s395 + $0x28] sm:$0xff]
        %v1691 = vld [vmem:[%s395 + $0x30] sm:$0xff]
        %v1692 = vld [vmem:[%s395 + $0x38] sm:$0xff]
        %v1694 = vsel %vm1074, %v1622, 0
        %v1697 = vsel %vm1074, %v1625, 0
        %v1700 = vsel %vm1074, %v1628, 0
        %v1703 = vsel %vm1074, %v1631, 0
        %v1706 = vsel %vm1074, %v1634, 0
        %v1709 = vsel %vm1074, %v1637, 0
        %v1712 = vsel %vm1074, %v1640, 0
        %v1715 = vsel %vm1074, %v1643, 0
        %v1718 = vsel %vm1074, %v1646, 0
        %v1721 = vsel %vm1074, %v1649, 0
        %v1724 = vsel %vm1074, %v1652, 0
        %v1727 = vsel %vm1074, %v1655, 0
        %v1730 = vsel %vm1074, %v1658, 0
        %v1733 = vsel %vm1074, %v1661, 0
        %v1736 = vsel %vm1074, %v1664, 0
        %v1739 = vsel %vm1074, %v1667, 0
        %1741 = vmatpush.msra.mxu0 0.0
        %1742 = vmatpush.msra.mxu0 0.0
        %1743 = vmatpush.msra.mxu0 0.0
        %1744 = vmatpush.msra.mxu0 0.0
        %1745 = vmatpush.msra.mxu0 0.0
        %1746 = vmatpush.msra.mxu0 0.0
        %1747 = vmatpush.msra.mxu0 0.0
        %1748 = vmatpush.msra.mxu0 0.0
        %1749 = vmatpush.msra.mxu0 %v1692
        %1750 = vmatpush.msra.mxu0 %v1691
        %1751 = vmatpush.msra.mxu0 %v1690
        %1752 = vmatpush.msra.mxu0 %v1689
        %1753 = vmatpush.msra.mxu0 %v1688
        %1754 = vmatpush.msra.mxu0 %v1687
        %1755 = vmatpush.msra.mxu0 %v1686
        %1756 = vmatpush.msra.mxu0 %v1685
        %1757 = vmatmul.f32.gmra.mxu0 %v1694
        %v1758 = vpop.f32.mrf.mxu0
        %v1759 = vadd.f32 0.0, %v1758
        %1760 = vmatmul.f32.gmra.mxu0 %v1697
        %v1761 = vpop.f32.mrf.mxu0
        %v1762 = vadd.f32 0.0, %v1761
        %1763 = vmatmul.f32.gmra.mxu0 %v1700
        %v1764 = vpop.f32.mrf.mxu0
        %v1765 = vadd.f32 0.0, %v1764
        %1766 = vmatmul.f32.gmra.mxu0 %v1703
        %v1767 = vpop.f32.mrf.mxu0
        %v1768 = vadd.f32 0.0, %v1767
        %1769 = vmatmul.f32.gmra.mxu0 %v1706
        %v1770 = vpop.f32.mrf.mxu0
        %v1771 = vadd.f32 0.0, %v1770
        %1772 = vmatmul.f32.gmra.mxu0 %v1709
        %v1773 = vpop.f32.mrf.mxu0
        %v1774 = vadd.f32 0.0, %v1773
        %1775 = vmatmul.f32.gmra.mxu0 %v1712
        %v1776 = vpop.f32.mrf.mxu0
        %v1777 = vadd.f32 0.0, %v1776
        %1778 = vmatmul.f32.gmra.mxu0 %v1715
        %v1779 = vpop.f32.mrf.mxu0
        %v1780 = vadd.f32 0.0, %v1779
        %1781 = vmatmul.f32.gmra.mxu0 %v1718
        %v1782 = vpop.f32.mrf.mxu0
        %v1783 = vadd.f32 0.0, %v1782
        %1784 = vmatmul.f32.gmra.mxu0 %v1721
        %v1785 = vpop.f32.mrf.mxu0
        %v1786 = vadd.f32 0.0, %v1785
        %1787 = vmatmul.f32.gmra.mxu0 %v1724
        %v1788 = vpop.f32.mrf.mxu0
        %v1789 = vadd.f32 0.0, %v1788
        %1790 = vmatmul.f32.gmra.mxu0 %v1727
        %v1791 = vpop.f32.mrf.mxu0
        %v1792 = vadd.f32 0.0, %v1791
        %1793 = vmatmul.f32.gmra.mxu0 %v1730
        %v1794 = vpop.f32.mrf.mxu0
        %v1795 = vadd.f32 0.0, %v1794
        %1796 = vmatmul.f32.gmra.mxu0 %v1733
        %v1797 = vpop.f32.mrf.mxu0
        %v1798 = vadd.f32 0.0, %v1797
        %1799 = vmatmul.f32.gmra.mxu0 %v1736
        %v1800 = vpop.f32.mrf.mxu0
        %v1801 = vadd.f32 0.0, %v1800
        %1802 = vmatmul.f32.gmra.mxu0 %v1739
        %v1803 = vpop.f32.mrf.mxu0
        %v1804 = vadd.f32 0.0, %v1803
        %1805 = vdwg.mxu0
        %v1806 = vadd.f32 %v1669, %v1759
        %v1807 = vadd.f32 %v1670, %v1762
        %v1808 = vadd.f32 %v1671, %v1765
        %v1809 = vadd.f32 %v1672, %v1768
        %v1810 = vadd.f32 %v1673, %v1771
        %v1811 = vadd.f32 %v1674, %v1774
        %v1812 = vadd.f32 %v1675, %v1777
        %v1813 = vadd.f32 %v1676, %v1780
        %v1814 = vadd.f32 %v1677, %v1783
        %v1815 = vadd.f32 %v1678, %v1786
        %v1816 = vadd.f32 %v1679, %v1789
        %v1817 = vadd.f32 %v1680, %v1792
        %v1818 = vadd.f32 %v1681, %v1795
        %v1819 = vadd.f32 %v1682, %v1798
        %v1820 = vadd.f32 %v1683, %v1801
        %v1821 = vadd.f32 %v1684, %v1804
        %1822 = vst [vmem:[#allocation3] sm:$0xff] %v1806
        %1823 = vst [vmem:[#allocation3 + $0x8] sm:$0xff] %v1807
        %1824 = vst [vmem:[#allocation3 + $0x10] sm:$0xff] %v1808
        %1825 = vst [vmem:[#allocation3 + $0x18] sm:$0xff] %v1809
        %1826 = vst [vmem:[#allocation3 + $0x20] sm:$0xff] %v1810
        %1827 = vst [vmem:[#allocation3 + $0x28] sm:$0xff] %v1811
        %1828 = vst [vmem:[#allocation3 + $0x30] sm:$0xff] %v1812
        %1829 = vst [vmem:[#allocation3 + $0x38] sm:$0xff] %v1813
        %1830 = vst [vmem:[#allocation3 + $0x40] sm:$0xff] %v1814
        %1831 = vst [vmem:[#allocation3 + $0x48] sm:$0xff] %v1815
        %1832 = vst [vmem:[#allocation3 + $0x50] sm:$0xff] %v1816
        %1833 = vst [vmem:[#allocation3 + $0x58] sm:$0xff] %v1817
        %1834 = vst [vmem:[#allocation3 + $0x60] sm:$0xff] %v1818
        %1835 = vst [vmem:[#allocation3 + $0x68] sm:$0xff] %v1819
        %1836 = vst [vmem:[#allocation3 + $0x70] sm:$0xff] %v1820
        %1837 = vst [vmem:[#allocation3 + $0x78] sm:$0xff] %v1821
        %p1838 = scmp.eq.s32.totalorder %s27, 7
        // Predicated region
        $region57: #{tpu_custom_call.1} parent=51 // pred_check
          %p1839 = pneg %p1838
        $region58: #{tpu_custom_call.1} parent=51 // pred_check_branch
          %1841 = sbr.rel (%p1839) target = $region60
        $region59: #{tpu_custom_call.1} parent=51 // pred_region
          %v1842 = vld [vmem:[#allocation3] sm:$0xff]
          %v1843 = vld [vmem:[#allocation3 + $0x8] sm:$0xff]
          %v1844 = vld [vmem:[#allocation3 + $0x10] sm:$0xff]
          %v1845 = vld [vmem:[#allocation3 + $0x18] sm:$0xff]
          %v1846 = vld [vmem:[#allocation3 + $0x20] sm:$0xff]
          %v1847 = vld [vmem:[#allocation3 + $0x28] sm:$0xff]
          %v1848 = vld [vmem:[#allocation3 + $0x30] sm:$0xff]
          %v1849 = vld [vmem:[#allocation3 + $0x38] sm:$0xff]
          %v1850 = vld [vmem:[#allocation3 + $0x40] sm:$0xff]
          %v1851 = vld [vmem:[#allocation3 + $0x48] sm:$0xff]
          %v1852 = vld [vmem:[#allocation3 + $0x50] sm:$0xff]
          %v1853 = vld [vmem:[#allocation3 + $0x58] sm:$0xff]
          %v1854 = vld [vmem:[#allocation3 + $0x60] sm:$0xff]
          %v1855 = vld [vmem:[#allocation3 + $0x68] sm:$0xff]
          %v1856 = vld [vmem:[#allocation3 + $0x70] sm:$0xff]
          %v1857 = vld [vmem:[#allocation3 + $0x78] sm:$0xff]
          %v1858 = vld [vmem:[%s7] sm:$0x1]
          %v1860 = vperm.slane %v1858, 0
          %v1862 = vadd.f32 %v1842, %v1860
          %v1863 = vadd.f32 %v1843, %v1860
          %v1864 = vadd.f32 %v1844, %v1860
          %v1865 = vadd.f32 %v1845, %v1860
          %v1866 = vadd.f32 %v1846, %v1860
          %v1867 = vadd.f32 %v1847, %v1860
          %v1868 = vadd.f32 %v1848, %v1860
          %v1869 = vadd.f32 %v1849, %v1860
          %v1870 = vadd.f32 %v1850, %v1860
          %v1871 = vadd.f32 %v1851, %v1860
          %v1872 = vadd.f32 %v1852, %v1860
          %v1873 = vadd.f32 %v1853, %v1860
          %v1874 = vadd.f32 %v1854, %v1860
          %v1875 = vadd.f32 %v1855, %v1860
          %v1876 = vadd.f32 %v1856, %v1860
          %v1877 = vadd.f32 %v1857, %v1860
          %1878 = vst [vmem:[%s370] sm:$0xff] %v1862
          %1879 = vst [vmem:[%s370 + $0x8] sm:$0xff] %v1863
          %1880 = vst [vmem:[%s370 + $0x10] sm:$0xff] %v1864
          %1881 = vst [vmem:[%s370 + $0x18] sm:$0xff] %v1865
          %1882 = vst [vmem:[%s370 + $0x20] sm:$0xff] %v1866
          %1883 = vst [vmem:[%s370 + $0x28] sm:$0xff] %v1867
          %1884 = vst [vmem:[%s370 + $0x30] sm:$0xff] %v1868
          %1885 = vst [vmem:[%s370 + $0x38] sm:$0xff] %v1869
          %1886 = vst [vmem:[%s370 + $0x40] sm:$0xff] %v1870
          %1887 = vst [vmem:[%s370 + $0x48] sm:$0xff] %v1871
          %1888 = vst [vmem:[%s370 + $0x50] sm:$0xff] %v1872
          %1889 = vst [vmem:[%s370 + $0x58] sm:$0xff] %v1873
          %1890 = vst [vmem:[%s370 + $0x60] sm:$0xff] %v1874
          %1891 = vst [vmem:[%s370 + $0x68] sm:$0xff] %v1875
          %1892 = vst [vmem:[%s370 + $0x70] sm:$0xff] %v1876
          %1893 = vst [vmem:[%s370 + $0x78] sm:$0xff] %v1877
        $region60: #{tpu_custom_call.1} parent=51 // pred_fallthru
          _
        %s1894 = sand.u32 %s235, 1
        %s1895 = scalar_lea.sflag [#allocation5], %s1894
        %s1896 = sand.u32 %s235, 1
        %s1897 = smul.addr %s1896, 128
        %s1898 = scalar_lea.vmem [#allocation4], %s1897
        // Predicated region
        $region61: #{tpu_custom_call.1} parent=51 // pred_check
          %p1899 = pneg %p245
        $region62: #{tpu_custom_call.1} parent=51 // pred_check_branch
          %1901 = sbr.rel (%p1899) target = $region64
        $region63: #{tpu_custom_call.1} parent=51 // pred_region
          %1903 = vsyncadd %s1895, 0
          %s1904 = smul.addr %s26, 16
          %s1905 = smul.addr %s1904, 8
          %s1906 = scalar_lea.hbm %s8, %s1905
          %s1907 = sshll.u32 %s1898, 4
          %s1908 = int_to_ptr.vmem [resolvable:$true] %s1907
          %s1909 = sshll.u32 %s1906, 4
          %s1910 = int_to_ptr.hbm [resolvable:$true] %s1909
          %1915 = dma.vmem_to_hbm [thread:$0]  %s1908, 2048, %s1910, %s1895, 128, 128, 8
        $region64: #{tpu_custom_call.1} parent=51 // pred_fallthru
          _
      $region52: #{tpu_custom_call.1} parent=5 // pred_fallthru
        _
      %p1916 = scmp.le.s32.totalorder 2, %s17
      // Predicated region
      $region65: #{tpu_custom_call.1} parent=5 // pred_check
        %p1917 = pneg %p1916
      $region66: #{tpu_custom_call.1} parent=5 // pred_check_branch
        %1919 = sbr.rel (%p1917) target = $region68
      $region67: #{tpu_custom_call.1} parent=5 // pred_region
        %s1920 = ssub.s32 %s17, 2
        // Predicated region
        $region69: #{tpu_custom_call.1} parent=67 // pred_check
          %p1921 = pneg %p251
        $region70: #{tpu_custom_call.1} parent=67 // pred_check_branch
          %1923 = sbr.rel (%p1921) target = $region72
        $region71: #{tpu_custom_call.1} parent=67 // pred_region
          %s1924 = sand.u32 %s236, 1
          %s1925 = scalar_lea.sflag [#allocation5], %s1924
          %s1926 = sand.u32 %s236, 1
          %s1927 = smul.addr %s1926, 128
          %s1928 = scalar_lea.vmem [#allocation4], %s1927
          %1930 = dma.done %s1925, 2048
        $region72: #{tpu_custom_call.1} parent=67 // pred_fallthru
          _
      $region68: #{tpu_custom_call.1} parent=5 // pred_fallthru
        _
    $region6: #{tpu_custom_call.1} parent=1 // loop_footer
      %s21 = sadd.s32 1, %s17
    $region7: #{tpu_custom_call.1} parent=1 // loop_footer_branch
      %16 = sbr.rel target = $region3
    $region8: #{tpu_custom_call.1} parent=1 // loop_exit
      _
    %1931 = vsyncpa [#allocation5], 1
    %s1932 = scalar_lea.sflag [#allocation5], 1
    %1933 = vsyncpa %s1932, 1

</llo_original>
